<compile_context>
chip_gen: v5e
topology: v5e:2x2
jax: 0.10.0
libtpu: 0.0.40
codegen_flags: <defaults>
</compile_context>

<pallas_src>
import jax
import jax.numpy as jnp
from jax.experimental import pallas as pl
from jax.experimental.pallas import tpu as pltpu


def _round_up(x, m):
    return ((x + m - 1) // m) * m


def lstm_pallas_forward(x, h0, c0, layer_params, w_lin_t, b_lin):
    """Run the full LSTM + linear-head forward in one Pallas kernel.

    Args:
      x:            (B, T, I)  float32, batch_first (PyTorch convention).
      h0, c0:       (L, B, H)  float32 initial hidden / cell states.
      layer_params: list of L tuples (w_ih_t, w_hh_t, b):
                      w_ih_t: (I or H, 4H)  -- transposed weight_ih_l{k}
                      w_hh_t: (H, 4H)       -- transposed weight_hh_l{k}
                      b:      (1, 4H)       -- bias_ih + bias_hh
      w_lin_t:      (H, O)  transposed linear weight.
      b_lin:        (1, O)  linear bias.

    Returns:
      pred: (B, O) == linear(lstm(x)[:, -1, :])
    """
    B, T, I = x.shape
    L, _, H = h0.shape
    O = w_lin_t.shape[1]

    LANE, SUBLANE = 128, 8
    Op = _round_up(O, LANE)     # lane-dense output store
    Bp = _round_up(B, SUBLANE)  # sublane-full batch

    f32 = jnp.float32

    # sigmoid(z) = 0.5*tanh(z/2) + 0.5: pre-scale the i/f/o gate columns by 0.5
    # (exact, power of two) so one tanh pass over the packed (Bp, 4H) gate
    # vector yields all four gates (g keeps its natural scale for tanh(z_g)).
    gate_scale = jnp.concatenate(
        [jnp.full((H,), 0.5, f32), jnp.full((H,), 0.5, f32),
         jnp.ones((H,), f32), jnp.full((H,), 0.5, f32)])

    # ---- wrapper-side layout plumbing (all static, outside the kernel) -----
    x_tm = jnp.transpose(x, (1, 0, 2))                          # (T, B, I)
    x_tm = jnp.zeros((T, Bp, I), f32).at[:, :B, :].set(x_tm)    # pad batch
    x_flat = x_tm.reshape(T * Bp, I)                            # time-major flat

    h0_p = jnp.zeros((L, Bp, H), f32).at[:, :B, :].set(h0)
    c0_p = jnp.zeros((L, Bp, H), f32).at[:, :B, :].set(c0)

    flat_params = []
    for (w_ih_t, w_hh_t, b) in layer_params:
        flat_params += [w_ih_t * gate_scale[None, :],
                        w_hh_t * gate_scale[None, :],
                        b * gate_scale[None, :]]

    w_lin_p = jnp.zeros((H, Op), f32).at[:, :O].set(w_lin_t)
    b_lin_p = jnp.zeros((1, Op), f32).at[:, :O].set(b_lin)

    inputs = [x_flat, h0_p, c0_p] + flat_params + [w_lin_p, b_lin_p]

    def kernel(*refs):
        x_ref, h0_ref, c0_ref = refs[0:3]
        layer_refs = refs[3:3 + 3 * L]
        w_lin_ref = refs[3 + 3 * L]
        b_lin_ref = refs[4 + 3 * L]
        out_ref = refs[5 + 3 * L]
        seq_ref = refs[6 + 3 * L]   # VMEM (T*Bp, H): previous layer's hidden seq

        inp = x_ref[...]            # (T*Bp, in_dim) current layer's input seq
        h_last = None
        for l in range(L):                      # static Python loop over layers
            w_ih = layer_refs[3 * l][...]       # (in_dim, 4H)
            w_hh = layer_refs[3 * l + 1][...]   # (H, 4H)
            b = layer_refs[3 * l + 2][...]      # (1, 4H)

            # Hoisted input projection: ONE MXU matmul over all timesteps with
            # the bias folded in; result stays in registers (8 vregs).
            xproj = jnp.dot(inp, w_ih, preferred_element_type=jnp.float32) + b

            store_seq = l < L - 1   # top layer's sequence is never read

            h = h0_ref[l]           # (Bp, H)
            c = c0_ref[l]
            for t in range(T):      # T = 8, fully unrolled serial recurrence
                z = xproj[t * Bp:(t + 1) * Bp, :] + jnp.dot(
                    h, w_hh, preferred_element_type=jnp.float32)   # (Bp, 4H)
                u = jnp.tanh(z)     # single full-vreg EUP pass for all 4 gates
                # PyTorch gate order i, f, g, o (i/f/o columns pre-scaled 0.5).
                i_g = 0.5 * u[:, 0 * H:1 * H] + 0.5     # sigmoid(z_i)
                f_g = 0.5 * u[:, 1 * H:2 * H] + 0.5     # sigmoid(z_f)
                g_g = u[:, 2 * H:3 * H]                 # tanh(z_g)
                o_g = 0.5 * u[:, 3 * H:4 * H] + 0.5     # sigmoid(z_o)
                c = f_g * c + i_g * g_g
                h = o_g * jnp.tanh(c)
                if store_seq:
                    seq_ref[t * Bp:(t + 1) * Bp, :] = h
            if store_seq:
                inp = seq_ref[...]  # (T*Bp, H) input for the next layer
            h_last = h

        # h_last == lstm_output[:, -1, :] (batch-padded); apply linear head.
        out_ref[...] = (
            jnp.dot(h_last, w_lin_ref[...], preferred_element_type=jnp.float32)
            + b_lin_ref[...])

    # Whole problem (<1 MiB) fits in VMEM: single invocation, no grid.
    out_p = pl.pallas_call(
        kernel,
        out_shape=jax.ShapeDtypeStruct((Bp, Op), jnp.float32),
        in_specs=[pl.BlockSpec(memory_space=pltpu.MemorySpace.VMEM)
                  for _ in inputs],
        out_specs=pl.BlockSpec(memory_space=pltpu.MemorySpace.VMEM),
        scratch_shapes=[pltpu.VMEM((T * Bp, H), jnp.float32)],
    )(*inputs)

    return out_p[:B, :O]


def lstm_reference(x, h0, c0, torch_layer_params, w_lin, b_lin):
    """Pure-JAX reference mirroring torch.nn.LSTM + Linear semantics."""
    B, T, _ = x.shape
    H = h0.shape[-1]
    inp = x
    for l, (w_ih, w_hh, b_ih, b_hh) in enumerate(torch_layer_params):
        h, c = h0[l], c0[l]
        outs = []
        for t in range(T):
            xt = inp[:, t, :]
            gates = xt @ w_ih.T + b_ih + h @ w_hh.T + b_hh
            i_g = jax.nn.sigmoid(gates[:, 0 * H:1 * H])
            f_g = jax.nn.sigmoid(gates[:, 1 * H:2 * H])
            g_g = jnp.tanh(gates[:, 2 * H:3 * H])
            o_g = jax.nn.sigmoid(gates[:, 3 * H:4 * H])
            c = f_g * c + i_g * g_g
            h = o_g * jnp.tanh(c)
            outs.append(h)
        inp = jnp.stack(outs, axis=1)
    return inp[:, -1, :] @ w_lin.T + b_lin


if __name__ == "__main__":
    # Module hyper-parameters (small, consistent with the PyTorch module).
    input_size, hidden_size, num_layers = 4, 32, 2
    output_size, batch_size, seq_len = 1, 2, 8
    H = hidden_size

    key = jax.random.PRNGKey(0)
    keys = iter(jax.random.split(key, 64))

    def uniform(shape, bound):
        return jax.random.uniform(
            next(keys), shape, jnp.float32, minval=-bound, maxval=bound)

    # Deterministic parameter init (PyTorch-style U(-1/sqrt(H), 1/sqrt(H))).
    k = 1.0 / jnp.sqrt(jnp.float32(hidden_size))
    torch_layer_params = []   # PyTorch-shaped params for the reference
    kernel_layer_params = []  # transposed / fused params for the kernel
    for l in range(num_layers):
        in_dim = input_size if l == 0 else hidden_size
        w_ih = uniform((4 * H, in_dim), k)
        w_hh = uniform((4 * H, H), k)
        b_ih = uniform((4 * H,), k)
        b_hh = uniform((4 * H,), k)
        torch_layer_params.append((w_ih, w_hh, b_ih, b_hh))
        kernel_layer_params.append(
            (w_ih.T, w_hh.T, (b_ih + b_hh).reshape(1, 4 * H)))

    k_lin = 1.0 / jnp.sqrt(jnp.float32(hidden_size))
    w_lin = uniform((output_size, hidden_size), k_lin)
    b_lin = uniform((output_size,), k_lin)

    # Inputs: batch_first sequence, plus the (randn) initial states.
    # TODO(synk): torch.randn h_0/c_0 is nondeterministic per call; here they
    # are deterministic draws from PRNGKey(0) so the kernel is reproducible.
    x = jax.random.normal(next(keys), (batch_size, seq_len, input_size),
                          jnp.float32)
    h0 = jax.random.normal(next(keys), (num_layers, batch_size, H), jnp.float32)
    c0 = jax.random.normal(next(keys), (num_layers, batch_size, H), jnp.float32)

    pred = lstm_pallas_forward(
        x, h0, c0, kernel_layer_params, w_lin.T, b_lin.reshape(1, output_size))
    pred = jax.block_until_ready(pred)

    ref = lstm_reference(x, h0, c0, torch_layer_params, w_lin, b_lin)
    assert pred.shape == (batch_size, output_size)
    assert jnp.allclose(pred, ref, rtol=1e-5, atol=1e-5), (pred, ref)

    print("KERNEL_OK")
</pallas_src>

<mosaic_0001>
module attributes {stable_mosaic.version = 11 : i64} {
  func.func @kernel(%arg0: memref<64x4xf32, #tpu.memory_space<vmem>>, %arg1: memref<2x8x32xf32, #tpu.memory_space<vmem>>, %arg2: memref<2x8x32xf32, #tpu.memory_space<vmem>>, %arg3: memref<4x128xf32, #tpu.memory_space<vmem>>, %arg4: memref<32x128xf32, #tpu.memory_space<vmem>>, %arg5: memref<1x128xf32, #tpu.memory_space<vmem>>, %arg6: memref<32x128xf32, #tpu.memory_space<vmem>>, %arg7: memref<32x128xf32, #tpu.memory_space<vmem>>, %arg8: memref<1x128xf32, #tpu.memory_space<vmem>>, %arg9: memref<32x128xf32, #tpu.memory_space<vmem>>, %arg10: memref<1x128xf32, #tpu.memory_space<vmem>>, %arg11: memref<8x128xf32, #tpu.memory_space<vmem>>, %arg12: memref<64x32xf32, #tpu.memory_space<vmem>>) attributes {dimension_semantics = [], scalar_prefetch = 0 : i64, scratch_operands = 1 : i64, tpu.core_type = #tpu.core_type<tc>} {
    %c0 = arith.constant 0 : index
    %c0_0 = arith.constant 0 : index
    %0 = vector.load %arg0[%c0, %c0_0] : memref<64x4xf32, #tpu.memory_space<vmem>>, vector<64x4xf32>
    %c0_1 = arith.constant 0 : index
    %c0_2 = arith.constant 0 : index
    %1 = vector.load %arg3[%c0_1, %c0_2] : memref<4x128xf32, #tpu.memory_space<vmem>>, vector<4x128xf32>
    %c0_3 = arith.constant 0 : index
    %c0_4 = arith.constant 0 : index
    %2 = vector.load %arg4[%c0_3, %c0_4] : memref<32x128xf32, #tpu.memory_space<vmem>>, vector<32x128xf32>
    %c0_5 = arith.constant 0 : index
    %c0_6 = arith.constant 0 : index
    %3 = vector.load %arg5[%c0_5, %c0_6] : memref<1x128xf32, #tpu.memory_space<vmem>>, vector<1x128xf32>
    %cst = arith.constant dense<0.000000e+00> : vector<64x128xf32>
    %4 = tpu.matmul %0, %1, %cst {dimension_numbers = #tpu.dot_dimension_numbers<[1], [0], [0], [1], [0, 0, 1, 1], [], []>} : vector<64x4xf32>, vector<4x128xf32>, vector<64x128xf32> -> vector<64x128xf32>
    %5 = vector.broadcast %3 : vector<1x128xf32> to vector<64x128xf32>
    %6 = arith.addf %4, %5 : vector<64x128xf32>
    %c0_7 = arith.constant 0 : index
    %c0_8 = arith.constant 0 : index
    %c0_9 = arith.constant 0 : index
    %7 = vector.load %arg1[%c0_7, %c0_8, %c0_9] : memref<2x8x32xf32, #tpu.memory_space<vmem>>, vector<1x8x32xf32>
    %8 = vector.shape_cast %7 : vector<1x8x32xf32> to vector<8x32xf32>
    %c0_10 = arith.constant 0 : index
    %c0_11 = arith.constant 0 : index
    %c0_12 = arith.constant 0 : index
    %9 = vector.load %arg2[%c0_10, %c0_11, %c0_12] : memref<2x8x32xf32, #tpu.memory_space<vmem>>, vector<1x8x32xf32>
    %10 = vector.shape_cast %9 : vector<1x8x32xf32> to vector<8x32xf32>
    %11 = vector.extract_strided_slice %6 {offsets = [0, 0], sizes = [8, 128], strides = [1, 1]} : vector<64x128xf32> to vector<8x128xf32>
    %cst_13 = arith.constant dense<0.000000e+00> : vector<8x128xf32>
    %12 = tpu.matmul %8, %2, %cst_13 {dimension_numbers = #tpu.dot_dimension_numbers<[1], [0], [0], [1], [0, 0, 1, 1], [], []>} : vector<8x32xf32>, vector<32x128xf32>, vector<8x128xf32> -> vector<8x128xf32>
    %13 = arith.addf %11, %12 : vector<8x128xf32>
    %14 = math.tanh %13 : vector<8x128xf32>
    %15 = vector.extract_strided_slice %14 {offsets = [0, 0], sizes = [8, 32], strides = [1, 1]} : vector<8x128xf32> to vector<8x32xf32>
    %cst_14 = arith.constant 5.000000e-01 : f32
    %16 = vector.broadcast %cst_14 : f32 to vector<8x32xf32>
    %17 = arith.mulf %16, %15 : vector<8x32xf32>
    %cst_15 = arith.constant 5.000000e-01 : f32
    %18 = vector.broadcast %cst_15 : f32 to vector<8x32xf32>
    %19 = arith.addf %17, %18 : vector<8x32xf32>
    %20 = vector.extract_strided_slice %14 {offsets = [0, 32], sizes = [8, 32], strides = [1, 1]} : vector<8x128xf32> to vector<8x32xf32>
    %cst_16 = arith.constant 5.000000e-01 : f32
    %21 = vector.broadcast %cst_16 : f32 to vector<8x32xf32>
    %22 = arith.mulf %21, %20 : vector<8x32xf32>
    %cst_17 = arith.constant 5.000000e-01 : f32
    %23 = vector.broadcast %cst_17 : f32 to vector<8x32xf32>
    %24 = arith.addf %22, %23 : vector<8x32xf32>
    %25 = vector.extract_strided_slice %14 {offsets = [0, 64], sizes = [8, 32], strides = [1, 1]} : vector<8x128xf32> to vector<8x32xf32>
    %26 = vector.extract_strided_slice %14 {offsets = [0, 96], sizes = [8, 32], strides = [1, 1]} : vector<8x128xf32> to vector<8x32xf32>
    %cst_18 = arith.constant 5.000000e-01 : f32
    %27 = vector.broadcast %cst_18 : f32 to vector<8x32xf32>
    %28 = arith.mulf %27, %26 : vector<8x32xf32>
    %cst_19 = arith.constant 5.000000e-01 : f32
    %29 = vector.broadcast %cst_19 : f32 to vector<8x32xf32>
    %30 = arith.addf %28, %29 : vector<8x32xf32>
    %31 = arith.mulf %24, %10 : vector<8x32xf32>
    %32 = arith.mulf %19, %25 : vector<8x32xf32>
    %33 = arith.addf %31, %32 : vector<8x32xf32>
    %34 = math.tanh %33 : vector<8x32xf32>
    %35 = arith.mulf %30, %34 : vector<8x32xf32>
    %c0_20 = arith.constant 0 : index
    %c0_21 = arith.constant 0 : index
    %36 = vector.load %arg12[%c0_20, %c0_21] : memref<64x32xf32, #tpu.memory_space<vmem>>, vector<8x32xf32>
    tpu.vector_store %arg12[%c0_20, %c0_21], %35 {strides = array<i32>} : memref<64x32xf32, #tpu.memory_space<vmem>>, vector<8x32xf32>,
    %37 = vector.extract_strided_slice %6 {offsets = [8, 0], sizes = [8, 128], strides = [1, 1]} : vector<64x128xf32> to vector<8x128xf32>
    %cst_22 = arith.constant dense<0.000000e+00> : vector<8x128xf32>
    %38 = tpu.matmul %35, %2, %cst_22 {dimension_numbers = #tpu.dot_dimension_numbers<[1], [0], [0], [1], [0, 0, 1, 1], [], []>} : vector<8x32xf32>, vector<32x128xf32>, vector<8x128xf32> -> vector<8x128xf32>
    %39 = arith.addf %37, %38 : vector<8x128xf32>
    %40 = math.tanh %39 : vector<8x128xf32>
    %41 = vector.extract_strided_slice %40 {offsets = [0, 0], sizes = [8, 32], strides = [1, 1]} : vector<8x128xf32> to vector<8x32xf32>
    %cst_23 = arith.constant 5.000000e-01 : f32
    %42 = vector.broadcast %cst_23 : f32 to vector<8x32xf32>
    %43 = arith.mulf %42, %41 : vector<8x32xf32>
    %cst_24 = arith.constant 5.000000e-01 : f32
    %44 = vector.broadcast %cst_24 : f32 to vector<8x32xf32>
    %45 = arith.addf %43, %44 : vector<8x32xf32>
    %46 = vector.extract_strided_slice %40 {offsets = [0, 32], sizes = [8, 32], strides = [1, 1]} : vector<8x128xf32> to vector<8x32xf32>
    %cst_25 = arith.constant 5.000000e-01 : f32
    %47 = vector.broadcast %cst_25 : f32 to vector<8x32xf32>
    %48 = arith.mulf %47, %46 : vector<8x32xf32>
    %cst_26 = arith.constant 5.000000e-01 : f32
    %49 = vector.broadcast %cst_26 : f32 to vector<8x32xf32>
    %50 = arith.addf %48, %49 : vector<8x32xf32>
    %51 = vector.extract_strided_slice %40 {offsets = [0, 64], sizes = [8, 32], strides = [1, 1]} : vector<8x128xf32> to vector<8x32xf32>
    %52 = vector.extract_strided_slice %40 {offsets = [0, 96], sizes = [8, 32], strides = [1, 1]} : vector<8x128xf32> to vector<8x32xf32>
    %cst_27 = arith.constant 5.000000e-01 : f32
    %53 = vector.broadcast %cst_27 : f32 to vector<8x32xf32>
    %54 = arith.mulf %53, %52 : vector<8x32xf32>
    %cst_28 = arith.constant 5.000000e-01 : f32
    %55 = vector.broadcast %cst_28 : f32 to vector<8x32xf32>
    %56 = arith.addf %54, %55 : vector<8x32xf32>
    %57 = arith.mulf %50, %33 : vector<8x32xf32>
    %58 = arith.mulf %45, %51 : vector<8x32xf32>
    %59 = arith.addf %57, %58 : vector<8x32xf32>
    %60 = math.tanh %59 : vector<8x32xf32>
    %61 = arith.mulf %56, %60 : vector<8x32xf32>
    %c8 = arith.constant 8 : index
    %c0_29 = arith.constant 0 : index
    %62 = vector.load %arg12[%c8, %c0_29] : memref<64x32xf32, #tpu.memory_space<vmem>>, vector<8x32xf32>
    tpu.vector_store %arg12[%c8, %c0_29], %61 {strides = array<i32>} : memref<64x32xf32, #tpu.memory_space<vmem>>, vector<8x32xf32>,
    %63 = vector.extract_strided_slice %6 {offsets = [16, 0], sizes = [8, 128], strides = [1, 1]} : vector<64x128xf32> to vector<8x128xf32>
    %cst_30 = arith.constant dense<0.000000e+00> : vector<8x128xf32>
    %64 = tpu.matmul %61, %2, %cst_30 {dimension_numbers = #tpu.dot_dimension_numbers<[1], [0], [0], [1], [0, 0, 1, 1], [], []>} : vector<8x32xf32>, vector<32x128xf32>, vector<8x128xf32> -> vector<8x128xf32>
    %65 = arith.addf %63, %64 : vector<8x128xf32>
    %66 = math.tanh %65 : vector<8x128xf32>
    %67 = vector.extract_strided_slice %66 {offsets = [0, 0], sizes = [8, 32], strides = [1, 1]} : vector<8x128xf32> to vector<8x32xf32>
    %cst_31 = arith.constant 5.000000e-01 : f32
    %68 = vector.broadcast %cst_31 : f32 to vector<8x32xf32>
    %69 = arith.mulf %68, %67 : vector<8x32xf32>
    %cst_32 = arith.constant 5.000000e-01 : f32
    %70 = vector.broadcast %cst_32 : f32 to vector<8x32xf32>
    %71 = arith.addf %69, %70 : vector<8x32xf32>
    %72 = vector.extract_strided_slice %66 {offsets = [0, 32], sizes = [8, 32], strides = [1, 1]} : vector<8x128xf32> to vector<8x32xf32>
    %cst_33 = arith.constant 5.000000e-01 : f32
    %73 = vector.broadcast %cst_33 : f32 to vector<8x32xf32>
    %74 = arith.mulf %73, %72 : vector<8x32xf32>
    %cst_34 = arith.constant 5.000000e-01 : f32
    %75 = vector.broadcast %cst_34 : f32 to vector<8x32xf32>
    %76 = arith.addf %74, %75 : vector<8x32xf32>
    %77 = vector.extract_strided_slice %66 {offsets = [0, 64], sizes = [8, 32], strides = [1, 1]} : vector<8x128xf32> to vector<8x32xf32>
    %78 = vector.extract_strided_slice %66 {offsets = [0, 96], sizes = [8, 32], strides = [1, 1]} : vector<8x128xf32> to vector<8x32xf32>
    %cst_35 = arith.constant 5.000000e-01 : f32
    %79 = vector.broadcast %cst_35 : f32 to vector<8x32xf32>
    %80 = arith.mulf %79, %78 : vector<8x32xf32>
    %cst_36 = arith.constant 5.000000e-01 : f32
    %81 = vector.broadcast %cst_36 : f32 to vector<8x32xf32>
    %82 = arith.addf %80, %81 : vector<8x32xf32>
    %83 = arith.mulf %76, %59 : vector<8x32xf32>
    %84 = arith.mulf %71, %77 : vector<8x32xf32>
    %85 = arith.addf %83, %84 : vector<8x32xf32>
    %86 = math.tanh %85 : vector<8x32xf32>
    %87 = arith.mulf %82, %86 : vector<8x32xf32>
    %c16 = arith.constant 16 : index
    %c0_37 = arith.constant 0 : index
    %88 = vector.load %arg12[%c16, %c0_37] : memref<64x32xf32, #tpu.memory_space<vmem>>, vector<8x32xf32>
    tpu.vector_store %arg12[%c16, %c0_37], %87 {strides = array<i32>} : memref<64x32xf32, #tpu.memory_space<vmem>>, vector<8x32xf32>,
    %89 = vector.extract_strided_slice %6 {offsets = [24, 0], sizes = [8, 128], strides = [1, 1]} : vector<64x128xf32> to vector<8x128xf32>
    %cst_38 = arith.constant dense<0.000000e+00> : vector<8x128xf32>
    %90 = tpu.matmul %87, %2, %cst_38 {dimension_numbers = #tpu.dot_dimension_numbers<[1], [0], [0], [1], [0, 0, 1, 1], [], []>} : vector<8x32xf32>, vector<32x128xf32>, vector<8x128xf32> -> vector<8x128xf32>
    %91 = arith.addf %89, %90 : vector<8x128xf32>
    %92 = math.tanh %91 : vector<8x128xf32>
    %93 = vector.extract_strided_slice %92 {offsets = [0, 0], sizes = [8, 32], strides = [1, 1]} : vector<8x128xf32> to vector<8x32xf32>
    %cst_39 = arith.constant 5.000000e-01 : f32
    %94 = vector.broadcast %cst_39 : f32 to vector<8x32xf32>
    %95 = arith.mulf %94, %93 : vector<8x32xf32>
    %cst_40 = arith.constant 5.000000e-01 : f32
    %96 = vector.broadcast %cst_40 : f32 to vector<8x32xf32>
    %97 = arith.addf %95, %96 : vector<8x32xf32>
    %98 = vector.extract_strided_slice %92 {offsets = [0, 32], sizes = [8, 32], strides = [1, 1]} : vector<8x128xf32> to vector<8x32xf32>
    %cst_41 = arith.constant 5.000000e-01 : f32
    %99 = vector.broadcast %cst_41 : f32 to vector<8x32xf32>
    %100 = arith.mulf %99, %98 : vector<8x32xf32>
    %cst_42 = arith.constant 5.000000e-01 : f32
    %101 = vector.broadcast %cst_42 : f32 to vector<8x32xf32>
    %102 = arith.addf %100, %101 : vector<8x32xf32>
    %103 = vector.extract_strided_slice %92 {offsets = [0, 64], sizes = [8, 32], strides = [1, 1]} : vector<8x128xf32> to vector<8x32xf32>
    %104 = vector.extract_strided_slice %92 {offsets = [0, 96], sizes = [8, 32], strides = [1, 1]} : vector<8x128xf32> to vector<8x32xf32>
    %cst_43 = arith.constant 5.000000e-01 : f32
    %105 = vector.broadcast %cst_43 : f32 to vector<8x32xf32>
    %106 = arith.mulf %105, %104 : vector<8x32xf32>
    %cst_44 = arith.constant 5.000000e-01 : f32
    %107 = vector.broadcast %cst_44 : f32 to vector<8x32xf32>
    %108 = arith.addf %106, %107 : vector<8x32xf32>
    %109 = arith.mulf %102, %85 : vector<8x32xf32>
    %110 = arith.mulf %97, %103 : vector<8x32xf32>
    %111 = arith.addf %109, %110 : vector<8x32xf32>
    %112 = math.tanh %111 : vector<8x32xf32>
    %113 = arith.mulf %108, %112 : vector<8x32xf32>
    %c24 = arith.constant 24 : index
    %c0_45 = arith.constant 0 : index
    %114 = vector.load %arg12[%c24, %c0_45] : memref<64x32xf32, #tpu.memory_space<vmem>>, vector<8x32xf32>
    tpu.vector_store %arg12[%c24, %c0_45], %113 {strides = array<i32>} : memref<64x32xf32, #tpu.memory_space<vmem>>, vector<8x32xf32>,
    %115 = vector.extract_strided_slice %6 {offsets = [32, 0], sizes = [8, 128], strides = [1, 1]} : vector<64x128xf32> to vector<8x128xf32>
    %cst_46 = arith.constant dense<0.000000e+00> : vector<8x128xf32>
    %116 = tpu.matmul %113, %2, %cst_46 {dimension_numbers = #tpu.dot_dimension_numbers<[1], [0], [0], [1], [0, 0, 1, 1], [], []>} : vector<8x32xf32>, vector<32x128xf32>, vector<8x128xf32> -> vector<8x128xf32>
    %117 = arith.addf %115, %116 : vector<8x128xf32>
    %118 = math.tanh %117 : vector<8x128xf32>
    %119 = vector.extract_strided_slice %118 {offsets = [0, 0], sizes = [8, 32], strides = [1, 1]} : vector<8x128xf32> to vector<8x32xf32>
    %cst_47 = arith.constant 5.000000e-01 : f32
    %120 = vector.broadcast %cst_47 : f32 to vector<8x32xf32>
    %121 = arith.mulf %120, %119 : vector<8x32xf32>
    %cst_48 = arith.constant 5.000000e-01 : f32
    %122 = vector.broadcast %cst_48 : f32 to vector<8x32xf32>
    %123 = arith.addf %121, %122 : vector<8x32xf32>
    %124 = vector.extract_strided_slice %118 {offsets = [0, 32], sizes = [8, 32], strides = [1, 1]} : vector<8x128xf32> to vector<8x32xf32>
    %cst_49 = arith.constant 5.000000e-01 : f32
    %125 = vector.broadcast %cst_49 : f32 to vector<8x32xf32>
    %126 = arith.mulf %125, %124 : vector<8x32xf32>
    %cst_50 = arith.constant 5.000000e-01 : f32
    %127 = vector.broadcast %cst_50 : f32 to vector<8x32xf32>
    %128 = arith.addf %126, %127 : vector<8x32xf32>
    %129 = vector.extract_strided_slice %118 {offsets = [0, 64], sizes = [8, 32], strides = [1, 1]} : vector<8x128xf32> to vector<8x32xf32>
    %130 = vector.extract_strided_slice %118 {offsets = [0, 96], sizes = [8, 32], strides = [1, 1]} : vector<8x128xf32> to vector<8x32xf32>
    %cst_51 = arith.constant 5.000000e-01 : f32
    %131 = vector.broadcast %cst_51 : f32 to vector<8x32xf32>
    %132 = arith.mulf %131, %130 : vector<8x32xf32>
    %cst_52 = arith.constant 5.000000e-01 : f32
    %133 = vector.broadcast %cst_52 : f32 to vector<8x32xf32>
    %134 = arith.addf %132, %133 : vector<8x32xf32>
    %135 = arith.mulf %128, %111 : vector<8x32xf32>
    %136 = arith.mulf %123, %129 : vector<8x32xf32>
    %137 = arith.addf %135, %136 : vector<8x32xf32>
    %138 = math.tanh %137 : vector<8x32xf32>
    %139 = arith.mulf %134, %138 : vector<8x32xf32>
    %c32 = arith.constant 32 : index
    %c0_53 = arith.constant 0 : index
    %140 = vector.load %arg12[%c32, %c0_53] : memref<64x32xf32, #tpu.memory_space<vmem>>, vector<8x32xf32>
    tpu.vector_store %arg12[%c32, %c0_53], %139 {strides = array<i32>} : memref<64x32xf32, #tpu.memory_space<vmem>>, vector<8x32xf32>,
    %141 = vector.extract_strided_slice %6 {offsets = [40, 0], sizes = [8, 128], strides = [1, 1]} : vector<64x128xf32> to vector<8x128xf32>
    %cst_54 = arith.constant dense<0.000000e+00> : vector<8x128xf32>
    %142 = tpu.matmul %139, %2, %cst_54 {dimension_numbers = #tpu.dot_dimension_numbers<[1], [0], [0], [1], [0, 0, 1, 1], [], []>} : vector<8x32xf32>, vector<32x128xf32>, vector<8x128xf32> -> vector<8x128xf32>
    %143 = arith.addf %141, %142 : vector<8x128xf32>
    %144 = math.tanh %143 : vector<8x128xf32>
    %145 = vector.extract_strided_slice %144 {offsets = [0, 0], sizes = [8, 32], strides = [1, 1]} : vector<8x128xf32> to vector<8x32xf32>
    %cst_55 = arith.constant 5.000000e-01 : f32
    %146 = vector.broadcast %cst_55 : f32 to vector<8x32xf32>
    %147 = arith.mulf %146, %145 : vector<8x32xf32>
    %cst_56 = arith.constant 5.000000e-01 : f32
    %148 = vector.broadcast %cst_56 : f32 to vector<8x32xf32>
    %149 = arith.addf %147, %148 : vector<8x32xf32>
    %150 = vector.extract_strided_slice %144 {offsets = [0, 32], sizes = [8, 32], strides = [1, 1]} : vector<8x128xf32> to vector<8x32xf32>
    %cst_57 = arith.constant 5.000000e-01 : f32
    %151 = vector.broadcast %cst_57 : f32 to vector<8x32xf32>
    %152 = arith.mulf %151, %150 : vector<8x32xf32>
    %cst_58 = arith.constant 5.000000e-01 : f32
    %153 = vector.broadcast %cst_58 : f32 to vector<8x32xf32>
    %154 = arith.addf %152, %153 : vector<8x32xf32>
    %155 = vector.extract_strided_slice %144 {offsets = [0, 64], sizes = [8, 32], strides = [1, 1]} : vector<8x128xf32> to vector<8x32xf32>
    %156 = vector.extract_strided_slice %144 {offsets = [0, 96], sizes = [8, 32], strides = [1, 1]} : vector<8x128xf32> to vector<8x32xf32>
    %cst_59 = arith.constant 5.000000e-01 : f32
    %157 = vector.broadcast %cst_59 : f32 to vector<8x32xf32>
    %158 = arith.mulf %157, %156 : vector<8x32xf32>
    %cst_60 = arith.constant 5.000000e-01 : f32
    %159 = vector.broadcast %cst_60 : f32 to vector<8x32xf32>
    %160 = arith.addf %158, %159 : vector<8x32xf32>
    %161 = arith.mulf %154, %137 : vector<8x32xf32>
    %162 = arith.mulf %149, %155 : vector<8x32xf32>
    %163 = arith.addf %161, %162 : vector<8x32xf32>
    %164 = math.tanh %163 : vector<8x32xf32>
    %165 = arith.mulf %160, %164 : vector<8x32xf32>
    %c40 = arith.constant 40 : index
    %c0_61 = arith.constant 0 : index
    %166 = vector.load %arg12[%c40, %c0_61] : memref<64x32xf32, #tpu.memory_space<vmem>>, vector<8x32xf32>
    tpu.vector_store %arg12[%c40, %c0_61], %165 {strides = array<i32>} : memref<64x32xf32, #tpu.memory_space<vmem>>, vector<8x32xf32>,
    %167 = vector.extract_strided_slice %6 {offsets = [48, 0], sizes = [8, 128], strides = [1, 1]} : vector<64x128xf32> to vector<8x128xf32>
    %cst_62 = arith.constant dense<0.000000e+00> : vector<8x128xf32>
    %168 = tpu.matmul %165, %2, %cst_62 {dimension_numbers = #tpu.dot_dimension_numbers<[1], [0], [0], [1], [0, 0, 1, 1], [], []>} : vector<8x32xf32>, vector<32x128xf32>, vector<8x128xf32> -> vector<8x128xf32>
    %169 = arith.addf %167, %168 : vector<8x128xf32>
    %170 = math.tanh %169 : vector<8x128xf32>
    %171 = vector.extract_strided_slice %170 {offsets = [0, 0], sizes = [8, 32], strides = [1, 1]} : vector<8x128xf32> to vector<8x32xf32>
    %cst_63 = arith.constant 5.000000e-01 : f32
    %172 = vector.broadcast %cst_63 : f32 to vector<8x32xf32>
    %173 = arith.mulf %172, %171 : vector<8x32xf32>
    %cst_64 = arith.constant 5.000000e-01 : f32
    %174 = vector.broadcast %cst_64 : f32 to vector<8x32xf32>
    %175 = arith.addf %173, %174 : vector<8x32xf32>
    %176 = vector.extract_strided_slice %170 {offsets = [0, 32], sizes = [8, 32], strides = [1, 1]} : vector<8x128xf32> to vector<8x32xf32>
    %cst_65 = arith.constant 5.000000e-01 : f32
    %177 = vector.broadcast %cst_65 : f32 to vector<8x32xf32>
    %178 = arith.mulf %177, %176 : vector<8x32xf32>
    %cst_66 = arith.constant 5.000000e-01 : f32
    %179 = vector.broadcast %cst_66 : f32 to vector<8x32xf32>
    %180 = arith.addf %178, %179 : vector<8x32xf32>
    %181 = vector.extract_strided_slice %170 {offsets = [0, 64], sizes = [8, 32], strides = [1, 1]} : vector<8x128xf32> to vector<8x32xf32>
    %182 = vector.extract_strided_slice %170 {offsets = [0, 96], sizes = [8, 32], strides = [1, 1]} : vector<8x128xf32> to vector<8x32xf32>
    %cst_67 = arith.constant 5.000000e-01 : f32
    %183 = vector.broadcast %cst_67 : f32 to vector<8x32xf32>
    %184 = arith.mulf %183, %182 : vector<8x32xf32>
    %cst_68 = arith.constant 5.000000e-01 : f32
    %185 = vector.broadcast %cst_68 : f32 to vector<8x32xf32>
    %186 = arith.addf %184, %185 : vector<8x32xf32>
    %187 = arith.mulf %180, %163 : vector<8x32xf32>
    %188 = arith.mulf %175, %181 : vector<8x32xf32>
    %189 = arith.addf %187, %188 : vector<8x32xf32>
    %190 = math.tanh %189 : vector<8x32xf32>
    %191 = arith.mulf %186, %190 : vector<8x32xf32>
    %c48 = arith.constant 48 : index
    %c0_69 = arith.constant 0 : index
    %192 = vector.load %arg12[%c48, %c0_69] : memref<64x32xf32, #tpu.memory_space<vmem>>, vector<8x32xf32>
    tpu.vector_store %arg12[%c48, %c0_69], %191 {strides = array<i32>} : memref<64x32xf32, #tpu.memory_space<vmem>>, vector<8x32xf32>,
    %193 = vector.extract_strided_slice %6 {offsets = [56, 0], sizes = [8, 128], strides = [1, 1]} : vector<64x128xf32> to vector<8x128xf32>
    %cst_70 = arith.constant dense<0.000000e+00> : vector<8x128xf32>
    %194 = tpu.matmul %191, %2, %cst_70 {dimension_numbers = #tpu.dot_dimension_numbers<[1], [0], [0], [1], [0, 0, 1, 1], [], []>} : vector<8x32xf32>, vector<32x128xf32>, vector<8x128xf32> -> vector<8x128xf32>
    %195 = arith.addf %193, %194 : vector<8x128xf32>
    %196 = math.tanh %195 : vector<8x128xf32>
    %197 = vector.extract_strided_slice %196 {offsets = [0, 0], sizes = [8, 32], strides = [1, 1]} : vector<8x128xf32> to vector<8x32xf32>
    %cst_71 = arith.constant 5.000000e-01 : f32
    %198 = vector.broadcast %cst_71 : f32 to vector<8x32xf32>
    %199 = arith.mulf %198, %197 : vector<8x32xf32>
    %cst_72 = arith.constant 5.000000e-01 : f32
    %200 = vector.broadcast %cst_72 : f32 to vector<8x32xf32>
    %201 = arith.addf %199, %200 : vector<8x32xf32>
    %202 = vector.extract_strided_slice %196 {offsets = [0, 32], sizes = [8, 32], strides = [1, 1]} : vector<8x128xf32> to vector<8x32xf32>
    %cst_73 = arith.constant 5.000000e-01 : f32
    %203 = vector.broadcast %cst_73 : f32 to vector<8x32xf32>
    %204 = arith.mulf %203, %202 : vector<8x32xf32>
    %cst_74 = arith.constant 5.000000e-01 : f32
    %205 = vector.broadcast %cst_74 : f32 to vector<8x32xf32>
    %206 = arith.addf %204, %205 : vector<8x32xf32>
    %207 = vector.extract_strided_slice %196 {offsets = [0, 64], sizes = [8, 32], strides = [1, 1]} : vector<8x128xf32> to vector<8x32xf32>
    %208 = vector.extract_strided_slice %196 {offsets = [0, 96], sizes = [8, 32], strides = [1, 1]} : vector<8x128xf32> to vector<8x32xf32>
    %cst_75 = arith.constant 5.000000e-01 : f32
    %209 = vector.broadcast %cst_75 : f32 to vector<8x32xf32>
    %210 = arith.mulf %209, %208 : vector<8x32xf32>
    %cst_76 = arith.constant 5.000000e-01 : f32
    %211 = vector.broadcast %cst_76 : f32 to vector<8x32xf32>
    %212 = arith.addf %210, %211 : vector<8x32xf32>
    %213 = arith.mulf %206, %189 : vector<8x32xf32>
    %214 = arith.mulf %201, %207 : vector<8x32xf32>
    %215 = arith.addf %213, %214 : vector<8x32xf32>
    %216 = math.tanh %215 : vector<8x32xf32>
    %217 = arith.mulf %212, %216 : vector<8x32xf32>
    %c56 = arith.constant 56 : index
    %c0_77 = arith.constant 0 : index
    %218 = vector.load %arg12[%c56, %c0_77] : memref<64x32xf32, #tpu.memory_space<vmem>>, vector<8x32xf32>
    tpu.vector_store %arg12[%c56, %c0_77], %217 {strides = array<i32>} : memref<64x32xf32, #tpu.memory_space<vmem>>, vector<8x32xf32>,
    %c0_78 = arith.constant 0 : index
    %c0_79 = arith.constant 0 : index
    %219 = vector.load %arg12[%c0_78, %c0_79] : memref<64x32xf32, #tpu.memory_space<vmem>>, vector<64x32xf32>
    %c0_80 = arith.constant 0 : index
    %c0_81 = arith.constant 0 : index
    %220 = vector.load %arg6[%c0_80, %c0_81] : memref<32x128xf32, #tpu.memory_space<vmem>>, vector<32x128xf32>
    %c0_82 = arith.constant 0 : index
    %c0_83 = arith.constant 0 : index
    %221 = vector.load %arg7[%c0_82, %c0_83] : memref<32x128xf32, #tpu.memory_space<vmem>>, vector<32x128xf32>
    %c0_84 = arith.constant 0 : index
    %c0_85 = arith.constant 0 : index
    %222 = vector.load %arg8[%c0_84, %c0_85] : memref<1x128xf32, #tpu.memory_space<vmem>>, vector<1x128xf32>
    %cst_86 = arith.constant dense<0.000000e+00> : vector<64x128xf32>
    %223 = tpu.matmul %219, %220, %cst_86 {dimension_numbers = #tpu.dot_dimension_numbers<[1], [0], [0], [1], [0, 0, 1, 1], [], []>} : vector<64x32xf32>, vector<32x128xf32>, vector<64x128xf32> -> vector<64x128xf32>
    %224 = vector.broadcast %222 : vector<1x128xf32> to vector<64x128xf32>
    %225 = arith.addf %223, %224 : vector<64x128xf32>
    %c1 = arith.constant 1 : index
    %c0_87 = arith.constant 0 : index
    %c0_88 = arith.constant 0 : index
    %226 = vector.load %arg1[%c1, %c0_87, %c0_88] : memref<2x8x32xf32, #tpu.memory_space<vmem>>, vector<1x8x32xf32>
    %227 = vector.shape_cast %226 : vector<1x8x32xf32> to vector<8x32xf32>
    %c1_89 = arith.constant 1 : index
    %c0_90 = arith.constant 0 : index
    %c0_91 = arith.constant 0 : index
    %228 = vector.load %arg2[%c1_89, %c0_90, %c0_91] : memref<2x8x32xf32, #tpu.memory_space<vmem>>, vector<1x8x32xf32>
    %229 = vector.shape_cast %228 : vector<1x8x32xf32> to vector<8x32xf32>
    %230 = vector.extract_strided_slice %225 {offsets = [0, 0], sizes = [8, 128], strides = [1, 1]} : vector<64x128xf32> to vector<8x128xf32>
    %cst_92 = arith.constant dense<0.000000e+00> : vector<8x128xf32>
    %231 = tpu.matmul %227, %221, %cst_92 {dimension_numbers = #tpu.dot_dimension_numbers<[1], [0], [0], [1], [0, 0, 1, 1], [], []>} : vector<8x32xf32>, vector<32x128xf32>, vector<8x128xf32> -> vector<8x128xf32>
    %232 = arith.addf %230, %231 : vector<8x128xf32>
    %233 = math.tanh %232 : vector<8x128xf32>
    %234 = vector.extract_strided_slice %233 {offsets = [0, 0], sizes = [8, 32], strides = [1, 1]} : vector<8x128xf32> to vector<8x32xf32>
    %cst_93 = arith.constant 5.000000e-01 : f32
    %235 = vector.broadcast %cst_93 : f32 to vector<8x32xf32>
    %236 = arith.mulf %235, %234 : vector<8x32xf32>
    %cst_94 = arith.constant 5.000000e-01 : f32
    %237 = vector.broadcast %cst_94 : f32 to vector<8x32xf32>
    %238 = arith.addf %236, %237 : vector<8x32xf32>
    %239 = vector.extract_strided_slice %233 {offsets = [0, 32], sizes = [8, 32], strides = [1, 1]} : vector<8x128xf32> to vector<8x32xf32>
    %cst_95 = arith.constant 5.000000e-01 : f32
    %240 = vector.broadcast %cst_95 : f32 to vector<8x32xf32>
    %241 = arith.mulf %240, %239 : vector<8x32xf32>
    %cst_96 = arith.constant 5.000000e-01 : f32
    %242 = vector.broadcast %cst_96 : f32 to vector<8x32xf32>
    %243 = arith.addf %241, %242 : vector<8x32xf32>
    %244 = vector.extract_strided_slice %233 {offsets = [0, 64], sizes = [8, 32], strides = [1, 1]} : vector<8x128xf32> to vector<8x32xf32>
    %245 = vector.extract_strided_slice %233 {offsets = [0, 96], sizes = [8, 32], strides = [1, 1]} : vector<8x128xf32> to vector<8x32xf32>
    %cst_97 = arith.constant 5.000000e-01 : f32
    %246 = vector.broadcast %cst_97 : f32 to vector<8x32xf32>
    %247 = arith.mulf %246, %245 : vector<8x32xf32>
    %cst_98 = arith.constant 5.000000e-01 : f32
    %248 = vector.broadcast %cst_98 : f32 to vector<8x32xf32>
    %249 = arith.addf %247, %248 : vector<8x32xf32>
    %250 = arith.mulf %243, %229 : vector<8x32xf32>
    %251 = arith.mulf %238, %244 : vector<8x32xf32>
    %252 = arith.addf %250, %251 : vector<8x32xf32>
    %253 = math.tanh %252 : vector<8x32xf32>
    %254 = arith.mulf %249, %253 : vector<8x32xf32>
    %255 = vector.extract_strided_slice %225 {offsets = [8, 0], sizes = [8, 128], strides = [1, 1]} : vector<64x128xf32> to vector<8x128xf32>
    %cst_99 = arith.constant dense<0.000000e+00> : vector<8x128xf32>
    %256 = tpu.matmul %254, %221, %cst_99 {dimension_numbers = #tpu.dot_dimension_numbers<[1], [0], [0], [1], [0, 0, 1, 1], [], []>} : vector<8x32xf32>, vector<32x128xf32>, vector<8x128xf32> -> vector<8x128xf32>
    %257 = arith.addf %255, %256 : vector<8x128xf32>
    %258 = math.tanh %257 : vector<8x128xf32>
    %259 = vector.extract_strided_slice %258 {offsets = [0, 0], sizes = [8, 32], strides = [1, 1]} : vector<8x128xf32> to vector<8x32xf32>
    %cst_100 = arith.constant 5.000000e-01 : f32
    %260 = vector.broadcast %cst_100 : f32 to vector<8x32xf32>
    %261 = arith.mulf %260, %259 : vector<8x32xf32>
    %cst_101 = arith.constant 5.000000e-01 : f32
    %262 = vector.broadcast %cst_101 : f32 to vector<8x32xf32>
    %263 = arith.addf %261, %262 : vector<8x32xf32>
    %264 = vector.extract_strided_slice %258 {offsets = [0, 32], sizes = [8, 32], strides = [1, 1]} : vector<8x128xf32> to vector<8x32xf32>
    %cst_102 = arith.constant 5.000000e-01 : f32
    %265 = vector.broadcast %cst_102 : f32 to vector<8x32xf32>
    %266 = arith.mulf %265, %264 : vector<8x32xf32>
    %cst_103 = arith.constant 5.000000e-01 : f32
    %267 = vector.broadcast %cst_103 : f32 to vector<8x32xf32>
    %268 = arith.addf %266, %267 : vector<8x32xf32>
    %269 = vector.extract_strided_slice %258 {offsets = [0, 64], sizes = [8, 32], strides = [1, 1]} : vector<8x128xf32> to vector<8x32xf32>
    %270 = vector.extract_strided_slice %258 {offsets = [0, 96], sizes = [8, 32], strides = [1, 1]} : vector<8x128xf32> to vector<8x32xf32>
    %cst_104 = arith.constant 5.000000e-01 : f32
    %271 = vector.broadcast %cst_104 : f32 to vector<8x32xf32>
    %272 = arith.mulf %271, %270 : vector<8x32xf32>
    %cst_105 = arith.constant 5.000000e-01 : f32
    %273 = vector.broadcast %cst_105 : f32 to vector<8x32xf32>
    %274 = arith.addf %272, %273 : vector<8x32xf32>
    %275 = arith.mulf %268, %252 : vector<8x32xf32>
    %276 = arith.mulf %263, %269 : vector<8x32xf32>
    %277 = arith.addf %275, %276 : vector<8x32xf32>
    %278 = math.tanh %277 : vector<8x32xf32>
    %279 = arith.mulf %274, %278 : vector<8x32xf32>
    %280 = vector.extract_strided_slice %225 {offsets = [16, 0], sizes = [8, 128], strides = [1, 1]} : vector<64x128xf32> to vector<8x128xf32>
    %cst_106 = arith.constant dense<0.000000e+00> : vector<8x128xf32>
    %281 = tpu.matmul %279, %221, %cst_106 {dimension_numbers = #tpu.dot_dimension_numbers<[1], [0], [0], [1], [0, 0, 1, 1], [], []>} : vector<8x32xf32>, vector<32x128xf32>, vector<8x128xf32> -> vector<8x128xf32>
    %282 = arith.addf %280, %281 : vector<8x128xf32>
    %283 = math.tanh %282 : vector<8x128xf32>
    %284 = vector.extract_strided_slice %283 {offsets = [0, 0], sizes = [8, 32], strides = [1, 1]} : vector<8x128xf32> to vector<8x32xf32>
    %cst_107 = arith.constant 5.000000e-01 : f32
    %285 = vector.broadcast %cst_107 : f32 to vector<8x32xf32>
    %286 = arith.mulf %285, %284 : vector<8x32xf32>
    %cst_108 = arith.constant 5.000000e-01 : f32
    %287 = vector.broadcast %cst_108 : f32 to vector<8x32xf32>
    %288 = arith.addf %286, %287 : vector<8x32xf32>
    %289 = vector.extract_strided_slice %283 {offsets = [0, 32], sizes = [8, 32], strides = [1, 1]} : vector<8x128xf32> to vector<8x32xf32>
    %cst_109 = arith.constant 5.000000e-01 : f32
    %290 = vector.broadcast %cst_109 : f32 to vector<8x32xf32>
    %291 = arith.mulf %290, %289 : vector<8x32xf32>
    %cst_110 = arith.constant 5.000000e-01 : f32
    %292 = vector.broadcast %cst_110 : f32 to vector<8x32xf32>
    %293 = arith.addf %291, %292 : vector<8x32xf32>
    %294 = vector.extract_strided_slice %283 {offsets = [0, 64], sizes = [8, 32], strides = [1, 1]} : vector<8x128xf32> to vector<8x32xf32>
    %295 = vector.extract_strided_slice %283 {offsets = [0, 96], sizes = [8, 32], strides = [1, 1]} : vector<8x128xf32> to vector<8x32xf32>
    %cst_111 = arith.constant 5.000000e-01 : f32
    %296 = vector.broadcast %cst_111 : f32 to vector<8x32xf32>
    %297 = arith.mulf %296, %295 : vector<8x32xf32>
    %cst_112 = arith.constant 5.000000e-01 : f32
    %298 = vector.broadcast %cst_112 : f32 to vector<8x32xf32>
    %299 = arith.addf %297, %298 : vector<8x32xf32>
    %300 = arith.mulf %293, %277 : vector<8x32xf32>
    %301 = arith.mulf %288, %294 : vector<8x32xf32>
    %302 = arith.addf %300, %301 : vector<8x32xf32>
    %303 = math.tanh %302 : vector<8x32xf32>
    %304 = arith.mulf %299, %303 : vector<8x32xf32>
    %305 = vector.extract_strided_slice %225 {offsets = [24, 0], sizes = [8, 128], strides = [1, 1]} : vector<64x128xf32> to vector<8x128xf32>
    %cst_113 = arith.constant dense<0.000000e+00> : vector<8x128xf32>
    %306 = tpu.matmul %304, %221, %cst_113 {dimension_numbers = #tpu.dot_dimension_numbers<[1], [0], [0], [1], [0, 0, 1, 1], [], []>} : vector<8x32xf32>, vector<32x128xf32>, vector<8x128xf32> -> vector<8x128xf32>
    %307 = arith.addf %305, %306 : vector<8x128xf32>
    %308 = math.tanh %307 : vector<8x128xf32>
    %309 = vector.extract_strided_slice %308 {offsets = [0, 0], sizes = [8, 32], strides = [1, 1]} : vector<8x128xf32> to vector<8x32xf32>
    %cst_114 = arith.constant 5.000000e-01 : f32
    %310 = vector.broadcast %cst_114 : f32 to vector<8x32xf32>
    %311 = arith.mulf %310, %309 : vector<8x32xf32>
    %cst_115 = arith.constant 5.000000e-01 : f32
    %312 = vector.broadcast %cst_115 : f32 to vector<8x32xf32>
    %313 = arith.addf %311, %312 : vector<8x32xf32>
    %314 = vector.extract_strided_slice %308 {offsets = [0, 32], sizes = [8, 32], strides = [1, 1]} : vector<8x128xf32> to vector<8x32xf32>
    %cst_116 = arith.constant 5.000000e-01 : f32
    %315 = vector.broadcast %cst_116 : f32 to vector<8x32xf32>
    %316 = arith.mulf %315, %314 : vector<8x32xf32>
    %cst_117 = arith.constant 5.000000e-01 : f32
    %317 = vector.broadcast %cst_117 : f32 to vector<8x32xf32>
    %318 = arith.addf %316, %317 : vector<8x32xf32>
    %319 = vector.extract_strided_slice %308 {offsets = [0, 64], sizes = [8, 32], strides = [1, 1]} : vector<8x128xf32> to vector<8x32xf32>
    %320 = vector.extract_strided_slice %308 {offsets = [0, 96], sizes = [8, 32], strides = [1, 1]} : vector<8x128xf32> to vector<8x32xf32>
    %cst_118 = arith.constant 5.000000e-01 : f32
    %321 = vector.broadcast %cst_118 : f32 to vector<8x32xf32>
    %322 = arith.mulf %321, %320 : vector<8x32xf32>
    %cst_119 = arith.constant 5.000000e-01 : f32
    %323 = vector.broadcast %cst_119 : f32 to vector<8x32xf32>
    %324 = arith.addf %322, %323 : vector<8x32xf32>
    %325 = arith.mulf %318, %302 : vector<8x32xf32>
    %326 = arith.mulf %313, %319 : vector<8x32xf32>
    %327 = arith.addf %325, %326 : vector<8x32xf32>
    %328 = math.tanh %327 : vector<8x32xf32>
    %329 = arith.mulf %324, %328 : vector<8x32xf32>
    %330 = vector.extract_strided_slice %225 {offsets = [32, 0], sizes = [8, 128], strides = [1, 1]} : vector<64x128xf32> to vector<8x128xf32>
    %cst_120 = arith.constant dense<0.000000e+00> : vector<8x128xf32>
    %331 = tpu.matmul %329, %221, %cst_120 {dimension_numbers = #tpu.dot_dimension_numbers<[1], [0], [0], [1], [0, 0, 1, 1], [], []>} : vector<8x32xf32>, vector<32x128xf32>, vector<8x128xf32> -> vector<8x128xf32>
    %332 = arith.addf %330, %331 : vector<8x128xf32>
    %333 = math.tanh %332 : vector<8x128xf32>
    %334 = vector.extract_strided_slice %333 {offsets = [0, 0], sizes = [8, 32], strides = [1, 1]} : vector<8x128xf32> to vector<8x32xf32>
    %cst_121 = arith.constant 5.000000e-01 : f32
    %335 = vector.broadcast %cst_121 : f32 to vector<8x32xf32>
    %336 = arith.mulf %335, %334 : vector<8x32xf32>
    %cst_122 = arith.constant 5.000000e-01 : f32
    %337 = vector.broadcast %cst_122 : f32 to vector<8x32xf32>
    %338 = arith.addf %336, %337 : vector<8x32xf32>
    %339 = vector.extract_strided_slice %333 {offsets = [0, 32], sizes = [8, 32], strides = [1, 1]} : vector<8x128xf32> to vector<8x32xf32>
    %cst_123 = arith.constant 5.000000e-01 : f32
    %340 = vector.broadcast %cst_123 : f32 to vector<8x32xf32>
    %341 = arith.mulf %340, %339 : vector<8x32xf32>
    %cst_124 = arith.constant 5.000000e-01 : f32
    %342 = vector.broadcast %cst_124 : f32 to vector<8x32xf32>
    %343 = arith.addf %341, %342 : vector<8x32xf32>
    %344 = vector.extract_strided_slice %333 {offsets = [0, 64], sizes = [8, 32], strides = [1, 1]} : vector<8x128xf32> to vector<8x32xf32>
    %345 = vector.extract_strided_slice %333 {offsets = [0, 96], sizes = [8, 32], strides = [1, 1]} : vector<8x128xf32> to vector<8x32xf32>
    %cst_125 = arith.constant 5.000000e-01 : f32
    %346 = vector.broadcast %cst_125 : f32 to vector<8x32xf32>
    %347 = arith.mulf %346, %345 : vector<8x32xf32>
    %cst_126 = arith.constant 5.000000e-01 : f32
    %348 = vector.broadcast %cst_126 : f32 to vector<8x32xf32>
    %349 = arith.addf %347, %348 : vector<8x32xf32>
    %350 = arith.mulf %343, %327 : vector<8x32xf32>
    %351 = arith.mulf %338, %344 : vector<8x32xf32>
    %352 = arith.addf %350, %351 : vector<8x32xf32>
    %353 = math.tanh %352 : vector<8x32xf32>
    %354 = arith.mulf %349, %353 : vector<8x32xf32>
    %355 = vector.extract_strided_slice %225 {offsets = [40, 0], sizes = [8, 128], strides = [1, 1]} : vector<64x128xf32> to vector<8x128xf32>
    %cst_127 = arith.constant dense<0.000000e+00> : vector<8x128xf32>
    %356 = tpu.matmul %354, %221, %cst_127 {dimension_numbers = #tpu.dot_dimension_numbers<[1], [0], [0], [1], [0, 0, 1, 1], [], []>} : vector<8x32xf32>, vector<32x128xf32>, vector<8x128xf32> -> vector<8x128xf32>
    %357 = arith.addf %355, %356 : vector<8x128xf32>
    %358 = math.tanh %357 : vector<8x128xf32>
    %359 = vector.extract_strided_slice %358 {offsets = [0, 0], sizes = [8, 32], strides = [1, 1]} : vector<8x128xf32> to vector<8x32xf32>
    %cst_128 = arith.constant 5.000000e-01 : f32
    %360 = vector.broadcast %cst_128 : f32 to vector<8x32xf32>
    %361 = arith.mulf %360, %359 : vector<8x32xf32>
    %cst_129 = arith.constant 5.000000e-01 : f32
    %362 = vector.broadcast %cst_129 : f32 to vector<8x32xf32>
    %363 = arith.addf %361, %362 : vector<8x32xf32>
    %364 = vector.extract_strided_slice %358 {offsets = [0, 32], sizes = [8, 32], strides = [1, 1]} : vector<8x128xf32> to vector<8x32xf32>
    %cst_130 = arith.constant 5.000000e-01 : f32
    %365 = vector.broadcast %cst_130 : f32 to vector<8x32xf32>
    %366 = arith.mulf %365, %364 : vector<8x32xf32>
    %cst_131 = arith.constant 5.000000e-01 : f32
    %367 = vector.broadcast %cst_131 : f32 to vector<8x32xf32>
    %368 = arith.addf %366, %367 : vector<8x32xf32>
    %369 = vector.extract_strided_slice %358 {offsets = [0, 64], sizes = [8, 32], strides = [1, 1]} : vector<8x128xf32> to vector<8x32xf32>
    %370 = vector.extract_strided_slice %358 {offsets = [0, 96], sizes = [8, 32], strides = [1, 1]} : vector<8x128xf32> to vector<8x32xf32>
    %cst_132 = arith.constant 5.000000e-01 : f32
    %371 = vector.broadcast %cst_132 : f32 to vector<8x32xf32>
    %372 = arith.mulf %371, %370 : vector<8x32xf32>
    %cst_133 = arith.constant 5.000000e-01 : f32
    %373 = vector.broadcast %cst_133 : f32 to vector<8x32xf32>
    %374 = arith.addf %372, %373 : vector<8x32xf32>
    %375 = arith.mulf %368, %352 : vector<8x32xf32>
    %376 = arith.mulf %363, %369 : vector<8x32xf32>
    %377 = arith.addf %375, %376 : vector<8x32xf32>
    %378 = math.tanh %377 : vector<8x32xf32>
    %379 = arith.mulf %374, %378 : vector<8x32xf32>
    %380 = vector.extract_strided_slice %225 {offsets = [48, 0], sizes = [8, 128], strides = [1, 1]} : vector<64x128xf32> to vector<8x128xf32>
    %cst_134 = arith.constant dense<0.000000e+00> : vector<8x128xf32>
    %381 = tpu.matmul %379, %221, %cst_134 {dimension_numbers = #tpu.dot_dimension_numbers<[1], [0], [0], [1], [0, 0, 1, 1], [], []>} : vector<8x32xf32>, vector<32x128xf32>, vector<8x128xf32> -> vector<8x128xf32>
    %382 = arith.addf %380, %381 : vector<8x128xf32>
    %383 = math.tanh %382 : vector<8x128xf32>
    %384 = vector.extract_strided_slice %383 {offsets = [0, 0], sizes = [8, 32], strides = [1, 1]} : vector<8x128xf32> to vector<8x32xf32>
    %cst_135 = arith.constant 5.000000e-01 : f32
    %385 = vector.broadcast %cst_135 : f32 to vector<8x32xf32>
    %386 = arith.mulf %385, %384 : vector<8x32xf32>
    %cst_136 = arith.constant 5.000000e-01 : f32
    %387 = vector.broadcast %cst_136 : f32 to vector<8x32xf32>
    %388 = arith.addf %386, %387 : vector<8x32xf32>
    %389 = vector.extract_strided_slice %383 {offsets = [0, 32], sizes = [8, 32], strides = [1, 1]} : vector<8x128xf32> to vector<8x32xf32>
    %cst_137 = arith.constant 5.000000e-01 : f32
    %390 = vector.broadcast %cst_137 : f32 to vector<8x32xf32>
    %391 = arith.mulf %390, %389 : vector<8x32xf32>
    %cst_138 = arith.constant 5.000000e-01 : f32
    %392 = vector.broadcast %cst_138 : f32 to vector<8x32xf32>
    %393 = arith.addf %391, %392 : vector<8x32xf32>
    %394 = vector.extract_strided_slice %383 {offsets = [0, 64], sizes = [8, 32], strides = [1, 1]} : vector<8x128xf32> to vector<8x32xf32>
    %395 = vector.extract_strided_slice %383 {offsets = [0, 96], sizes = [8, 32], strides = [1, 1]} : vector<8x128xf32> to vector<8x32xf32>
    %cst_139 = arith.constant 5.000000e-01 : f32
    %396 = vector.broadcast %cst_139 : f32 to vector<8x32xf32>
    %397 = arith.mulf %396, %395 : vector<8x32xf32>
    %cst_140 = arith.constant 5.000000e-01 : f32
    %398 = vector.broadcast %cst_140 : f32 to vector<8x32xf32>
    %399 = arith.addf %397, %398 : vector<8x32xf32>
    %400 = arith.mulf %393, %377 : vector<8x32xf32>
    %401 = arith.mulf %388, %394 : vector<8x32xf32>
    %402 = arith.addf %400, %401 : vector<8x32xf32>
    %403 = math.tanh %402 : vector<8x32xf32>
    %404 = arith.mulf %399, %403 : vector<8x32xf32>
    %405 = vector.extract_strided_slice %225 {offsets = [56, 0], sizes = [8, 128], strides = [1, 1]} : vector<64x128xf32> to vector<8x128xf32>
    %cst_141 = arith.constant dense<0.000000e+00> : vector<8x128xf32>
    %406 = tpu.matmul %404, %221, %cst_141 {dimension_numbers = #tpu.dot_dimension_numbers<[1], [0], [0], [1], [0, 0, 1, 1], [], []>} : vector<8x32xf32>, vector<32x128xf32>, vector<8x128xf32> -> vector<8x128xf32>
    %407 = arith.addf %405, %406 : vector<8x128xf32>
    %408 = math.tanh %407 : vector<8x128xf32>
    %409 = vector.extract_strided_slice %408 {offsets = [0, 0], sizes = [8, 32], strides = [1, 1]} : vector<8x128xf32> to vector<8x32xf32>
    %cst_142 = arith.constant 5.000000e-01 : f32
    %410 = vector.broadcast %cst_142 : f32 to vector<8x32xf32>
    %411 = arith.mulf %410, %409 : vector<8x32xf32>
    %cst_143 = arith.constant 5.000000e-01 : f32
    %412 = vector.broadcast %cst_143 : f32 to vector<8x32xf32>
    %413 = arith.addf %411, %412 : vector<8x32xf32>
    %414 = vector.extract_strided_slice %408 {offsets = [0, 32], sizes = [8, 32], strides = [1, 1]} : vector<8x128xf32> to vector<8x32xf32>
    %cst_144 = arith.constant 5.000000e-01 : f32
    %415 = vector.broadcast %cst_144 : f32 to vector<8x32xf32>
    %416 = arith.mulf %415, %414 : vector<8x32xf32>
    %cst_145 = arith.constant 5.000000e-01 : f32
    %417 = vector.broadcast %cst_145 : f32 to vector<8x32xf32>
    %418 = arith.addf %416, %417 : vector<8x32xf32>
    %419 = vector.extract_strided_slice %408 {offsets = [0, 64], sizes = [8, 32], strides = [1, 1]} : vector<8x128xf32> to vector<8x32xf32>
    %420 = vector.extract_strided_slice %408 {offsets = [0, 96], sizes = [8, 32], strides = [1, 1]} : vector<8x128xf32> to vector<8x32xf32>
    %cst_146 = arith.constant 5.000000e-01 : f32
    %421 = vector.broadcast %cst_146 : f32 to vector<8x32xf32>
    %422 = arith.mulf %421, %420 : vector<8x32xf32>
    %cst_147 = arith.constant 5.000000e-01 : f32
    %423 = vector.broadcast %cst_147 : f32 to vector<8x32xf32>
    %424 = arith.addf %422, %423 : vector<8x32xf32>
    %425 = arith.mulf %418, %402 : vector<8x32xf32>
    %426 = arith.mulf %413, %419 : vector<8x32xf32>
    %427 = arith.addf %425, %426 : vector<8x32xf32>
    %428 = math.tanh %427 : vector<8x32xf32>
    %429 = arith.mulf %424, %428 : vector<8x32xf32>
    %c0_148 = arith.constant 0 : index
    %c0_149 = arith.constant 0 : index
    %430 = vector.load %arg9[%c0_148, %c0_149] : memref<32x128xf32, #tpu.memory_space<vmem>>, vector<32x128xf32>
    %cst_150 = arith.constant dense<0.000000e+00> : vector<8x128xf32>
    %431 = tpu.matmul %429, %430, %cst_150 {dimension_numbers = #tpu.dot_dimension_numbers<[1], [0], [0], [1], [0, 0, 1, 1], [], []>} : vector<8x32xf32>, vector<32x128xf32>, vector<8x128xf32> -> vector<8x128xf32>
    %c0_151 = arith.constant 0 : index
    %c0_152 = arith.constant 0 : index
    %432 = vector.load %arg10[%c0_151, %c0_152] : memref<1x128xf32, #tpu.memory_space<vmem>>, vector<1x128xf32>
    %433 = vector.broadcast %432 : vector<1x128xf32> to vector<8x128xf32>
    %434 = arith.addf %431, %433 : vector<8x128xf32>
    %c0_153 = arith.constant 0 : index
    %c0_154 = arith.constant 0 : index
    %435 = vector.load %arg11[%c0_153, %c0_154] : memref<8x128xf32, #tpu.memory_space<vmem>>, vector<8x128xf32>
    tpu.vector_store %arg11[%c0_153, %c0_154], %434 {strides = array<i32>} : memref<8x128xf32, #tpu.memory_space<vmem>>, vector<8x128xf32>,
    return
  }
}

</mosaic_0001>

<llo_original>
// kernel: tpu_custom_call.1
$region0: #{tpu_custom_call.1}
  #allocation0 [shape = 'u32[]', space=smem, size = 0x4, offset = 0x4, fixed_abs, tag = 'smem constant byte address 0x4 - core index']
  #allocation1 [shape = 'u32[72,128]{1,0:T(1,128)}', space=vmem, size = 0x9000, scoped, tag = 'internal scratch']
  #allocation2 [shape = 'f32[64,32]{1,0:T(8,128)}', space=vmem, size = 0x8000, scoped, tag = 'scratch operand']
  %s0 = inlined_call_operand.vmem [shape: f32[64,4], index: 0, kind: input, shape index: {}]
  %s1 = inlined_call_operand.hbm [shape: f32[2,8,32], index: 1, kind: input, shape index: {}]
  %s2 = inlined_call_operand.hbm [shape: f32[2,8,32], index: 2, kind: input, shape index: {}]
  %s3 = inlined_call_operand.vmem [shape: f32[4,128], index: 3, kind: input, shape index: {}]
  %s4 = inlined_call_operand.vmem [shape: f32[32,128], index: 4, kind: input, shape index: {}]
  %s5 = inlined_call_operand.vmem [shape: f32[1,128], index: 5, kind: input, shape index: {}]
  %s6 = inlined_call_operand.vmem [shape: f32[32,128], index: 6, kind: input, shape index: {}]
  %s7 = inlined_call_operand.hbm [shape: f32[32,128], index: 7, kind: input, shape index: {}]
  %s8 = inlined_call_operand.vmem [shape: f32[1,128], index: 8, kind: input, shape index: {}]
  %s9 = inlined_call_operand.hbm [shape: f32[32,128], index: 9, kind: input, shape index: {}]
  %s10 = inlined_call_operand.vmem [shape: f32[1,128], index: 10, kind: input, shape index: {}]
  %s11 = inlined_call_operand.hbm [shape: f32[8,128], index: 11, kind: output, shape index: {}]
  %s12 = sld [smem:[#allocation0]]
  $region70: #{tpu_custom_call.1} parent=0
    _
  %s14 = ssub.s32 1, %s12
  %s15 = scalar_select 0, %s14, %s12
  $region1: #{tpu_custom_call.1} parent=0
    #allocation3 [shape = 'u8[8192]{0}', space=vmem, size = 0x2000, scoped, tag = 'input window, operand 1, single buffered']
    #allocation4 [shape = 's32[1]{0}', space=sflag, size = 0x4, scoped, tag = 'scoped memory for tpu_custom_call.1']
    #allocation5 [shape = 's32[1]{0}', space=sflag, size = 0x4, scoped, tag = 'scoped memory for tpu_custom_call.1']
    #allocation6 [shape = 'u8[8192]{0}', space=vmem, size = 0x2000, scoped, tag = 'input window, operand 2, single buffered']
    #allocation7 [shape = 's32[1]{0}', space=sflag, size = 0x4, scoped, tag = 'scoped memory for tpu_custom_call.1']
    #allocation8 [shape = 'u8[16384]{0}', space=vmem, size = 0x4000, scoped, tag = 'input window, operand 7, single buffered']
    #allocation9 [shape = 'u8[16384]{0}', space=vmem, size = 0x4000, scoped, tag = 'input window, operand 9, single buffered']
    #allocation10 [shape = 's32[1]{0}', space=sflag, size = 0x4, scoped, tag = 'scoped memory for tpu_custom_call.1']
    #allocation11 [shape = 'u8[4096]{0}', space=vmem, size = 0x1000, scoped, tag = 'output window, operand 0, single buffered']
    %16 = vsyncpa [#allocation4], 0
    %17 = vsyncpa [#allocation7], 0
    %18 = vsyncpa [#allocation10], 0
    %19 = vsyncpa [#allocation5], 0
    // Predicated region
    $region2: #{tpu_custom_call.1} parent=1 // pred_check
      _
    $region3: #{tpu_custom_call.1} parent=1 // pred_check_branch
      %21 = sbr.rel (0) target = $region5
    $region4: #{tpu_custom_call.1} parent=1 // pred_region
      _
    $region5: #{tpu_custom_call.1} parent=1 // pred_fallthru
      _
    // Predicated region
    $region6: #{tpu_custom_call.1} parent=1 // pred_check
      _
    $region7: #{tpu_custom_call.1} parent=1 // pred_check_branch
      %23 = sbr.rel (0) target = $region9
    $region8: #{tpu_custom_call.1} parent=1 // pred_region
      %25 = vsyncadd [#allocation4], 0
      %s26 = sshll.u32 %s1, 4
      %s27 = int_to_ptr.hbm [resolvable:$true] %s26
      %s28 = sshll.u32 [#allocation3], 4
      %s29 = int_to_ptr.vmem [resolvable:$true] %s28
      %34 = dma.hbm_to_vmem [thread:$0]  %s27, 256, %s29, [#allocation4], 128, 128, 8
    $region9: #{tpu_custom_call.1} parent=1 // pred_fallthru
      _
    // Predicated region
    $region10: #{tpu_custom_call.1} parent=1 // pred_check
      _
    $region11: #{tpu_custom_call.1} parent=1 // pred_check_branch
      %36 = sbr.rel (0) target = $region13
    $region12: #{tpu_custom_call.1} parent=1 // pred_region
      %38 = vsyncadd [#allocation7], 0
      %s39 = sshll.u32 %s2, 4
      %s40 = int_to_ptr.hbm [resolvable:$true] %s39
      %s41 = sshll.u32 [#allocation6], 4
      %s42 = int_to_ptr.vmem [resolvable:$true] %s41
      %47 = dma.hbm_to_vmem [thread:$0]  %s40, 256, %s42, [#allocation7], 128, 128, 8
    $region13: #{tpu_custom_call.1} parent=1 // pred_fallthru
      _
    // Predicated region
    $region14: #{tpu_custom_call.1} parent=1 // pred_check
      _
    $region15: #{tpu_custom_call.1} parent=1 // pred_check_branch
      %49 = sbr.rel (0) target = $region17
    $region16: #{tpu_custom_call.1} parent=1 // pred_region
      _
    $region17: #{tpu_custom_call.1} parent=1 // pred_fallthru
      _
    // Predicated region
    $region18: #{tpu_custom_call.1} parent=1 // pred_check
      _
    $region19: #{tpu_custom_call.1} parent=1 // pred_check_branch
      %51 = sbr.rel (0) target = $region21
    $region20: #{tpu_custom_call.1} parent=1 // pred_region
      _
    $region21: #{tpu_custom_call.1} parent=1 // pred_fallthru
      _
    // Predicated region
    $region22: #{tpu_custom_call.1} parent=1 // pred_check
      _
    $region23: #{tpu_custom_call.1} parent=1 // pred_check_branch
      %53 = sbr.rel (0) target = $region25
    $region24: #{tpu_custom_call.1} parent=1 // pred_region
      _
    $region25: #{tpu_custom_call.1} parent=1 // pred_fallthru
      _
    // Predicated region
    $region26: #{tpu_custom_call.1} parent=1 // pred_check
      _
    $region27: #{tpu_custom_call.1} parent=1 // pred_check_branch
      %55 = sbr.rel (0) target = $region29
    $region28: #{tpu_custom_call.1} parent=1 // pred_region
      _
    $region29: #{tpu_custom_call.1} parent=1 // pred_fallthru
      _
    // Predicated region
    $region30: #{tpu_custom_call.1} parent=1 // pred_check
      _
    $region31: #{tpu_custom_call.1} parent=1 // pred_check_branch
      %57 = sbr.rel (0) target = $region33
    $region32: #{tpu_custom_call.1} parent=1 // pred_region
      %59 = vsyncadd [#allocation7], 0
      %s60 = sshll.u32 %s7, 4
      %s61 = int_to_ptr.hbm [resolvable:$true] %s60
      %s62 = sshll.u32 [#allocation8], 4
      %s63 = int_to_ptr.vmem [resolvable:$true] %s62
      %68 = dma.hbm_to_vmem [thread:$0]  %s61, 512, %s63, [#allocation7], 128, 128, 8
    $region33: #{tpu_custom_call.1} parent=1 // pred_fallthru
      _
    // Predicated region
    $region34: #{tpu_custom_call.1} parent=1 // pred_check
      _
    $region35: #{tpu_custom_call.1} parent=1 // pred_check_branch
      %70 = sbr.rel (0) target = $region37
    $region36: #{tpu_custom_call.1} parent=1 // pred_region
      _
    $region37: #{tpu_custom_call.1} parent=1 // pred_fallthru
      _
    // Predicated region
    $region38: #{tpu_custom_call.1} parent=1 // pred_check
      _
    $region39: #{tpu_custom_call.1} parent=1 // pred_check_branch
      %72 = sbr.rel (0) target = $region41
    $region40: #{tpu_custom_call.1} parent=1 // pred_region
      %74 = vsyncadd [#allocation10], 0
      %s75 = sshll.u32 %s9, 4
      %s76 = int_to_ptr.hbm [resolvable:$true] %s75
      %s77 = sshll.u32 [#allocation9], 4
      %s78 = int_to_ptr.vmem [resolvable:$true] %s77
      %83 = dma.hbm_to_vmem [thread:$0]  %s76, 512, %s78, [#allocation10], 128, 128, 8
    $region41: #{tpu_custom_call.1} parent=1 // pred_fallthru
      _
    // Predicated region
    $region42: #{tpu_custom_call.1} parent=1 // pred_check
      _
    $region43: #{tpu_custom_call.1} parent=1 // pred_check_branch
      %85 = sbr.rel (0) target = $region45
    $region44: #{tpu_custom_call.1} parent=1 // pred_region
      _
    $region45: #{tpu_custom_call.1} parent=1 // pred_fallthru
      _
    // Predicated region
    $region46: #{tpu_custom_call.1} parent=1 // pred_check
      _
    $region47: #{tpu_custom_call.1} parent=1 // pred_check_branch
      %87 = sbr.rel (0) target = $region49
    $region48: #{tpu_custom_call.1} parent=1 // pred_region
      %89 = dma.done [#allocation4], 256
    $region49: #{tpu_custom_call.1} parent=1 // pred_fallthru
      _
    // Predicated region
    $region50: #{tpu_custom_call.1} parent=1 // pred_check
      _
    $region51: #{tpu_custom_call.1} parent=1 // pred_check_branch
      %91 = sbr.rel (0) target = $region53
    $region52: #{tpu_custom_call.1} parent=1 // pred_region
      %93 = dma.done [#allocation7], 256
    $region53: #{tpu_custom_call.1} parent=1 // pred_fallthru
      _
    // Predicated region
    $region54: #{tpu_custom_call.1} parent=1 // pred_check
      _
    $region55: #{tpu_custom_call.1} parent=1 // pred_check_branch
      %95 = sbr.rel (0) target = $region57
    $region56: #{tpu_custom_call.1} parent=1 // pred_region
      %97 = dma.done [#allocation7], 512
    $region57: #{tpu_custom_call.1} parent=1 // pred_fallthru
      _
    // Predicated region
    $region58: #{tpu_custom_call.1} parent=1 // pred_check
      _
    $region59: #{tpu_custom_call.1} parent=1 // pred_check_branch
      %99 = sbr.rel (0) target = $region61
    $region60: #{tpu_custom_call.1} parent=1 // pred_region
      %101 = dma.done [#allocation10], 512
    $region61: #{tpu_custom_call.1} parent=1 // pred_fallthru
      _
    %v102 = vld [vmem:[%s0] sm:$0xff]
    %v103 = vld [vmem:[%s0 + $0x8] sm:$0xff]
    %v104 = vld [vmem:[%s0 + $0x10] sm:$0xff]
    %v105 = vld [vmem:[%s0 + $0x18] sm:$0xff]
    %v106 = vld [vmem:[%s0 + $0x20] sm:$0xff]
    %v107 = vld [vmem:[%s0 + $0x28] sm:$0xff]
    %v108 = vld [vmem:[%s0 + $0x30] sm:$0xff]
    %v109 = vld [vmem:[%s0 + $0x38] sm:$0xff]
    %v110 = vld [vmem:[%s3] sm:$0xf]
    %v111 = vld [vmem:[%s4] sm:$0xff]
    %v112 = vld [vmem:[%s4 + $0x8] sm:$0xff]
    %v113 = vld [vmem:[%s4 + $0x10] sm:$0xff]
    %v114 = vld [vmem:[%s4 + $0x18] sm:$0xff]
    %v115 = vld [vmem:[%s5] sm:$0x1]
    %v117 = vperm.slane %v115, 0
    %vm119 = vcmask 31744
    %v121 = vsel %vm119, %v102, 0
    %v124 = vsel %vm119, %v103, 0
    %v127 = vsel %vm119, %v104, 0
    %v130 = vsel %vm119, %v105, 0
    %v133 = vsel %vm119, %v106, 0
    %v136 = vsel %vm119, %v107, 0
    %v139 = vsel %vm119, %v108, 0
    %v142 = vsel %vm119, %v109, 0
    %vm144 = vcmask 1043456
    %v146 = vsel %vm144, %v110, 0
    %148 = vmatpush.msra.mxu0 0.0
    %149 = vmatpush.msra.mxu0 0.0
    %150 = vmatpush.msra.mxu0 0.0
    %151 = vmatpush.msra.mxu0 0.0
    %152 = vmatpush.msra.mxu0 0.0
    %153 = vmatpush.msra.mxu0 0.0
    %154 = vmatpush.msra.mxu0 0.0
    %155 = vmatpush.msra.mxu0 0.0
    %156 = vmatpush.msra.mxu0 0.0
    %157 = vmatpush.msra.mxu0 0.0
    %158 = vmatpush.msra.mxu0 0.0
    %159 = vmatpush.msra.mxu0 0.0
    %160 = vmatpush.msra.mxu0 0.0
    %161 = vmatpush.msra.mxu0 0.0
    %162 = vmatpush.msra.mxu0 0.0
    %163 = vmatpush.msra.mxu0 %v146
    %164 = vmatmul.f32.gmra.mxu0 %v121
    %v165 = vpop.f32.mrf.mxu0
    %v166 = vadd.f32 %v117, %v165
    %167 = vmatmul.f32.gmra.mxu0 %v124
    %v168 = vpop.f32.mrf.mxu0
    %v169 = vadd.f32 %v117, %v168
    %170 = vmatmul.f32.gmra.mxu0 %v127
    %v171 = vpop.f32.mrf.mxu0
    %v172 = vadd.f32 %v117, %v171
    %173 = vmatmul.f32.gmra.mxu0 %v130
    %v174 = vpop.f32.mrf.mxu0
    %v175 = vadd.f32 %v117, %v174
    %176 = vmatmul.f32.gmra.mxu0 %v133
    %v177 = vpop.f32.mrf.mxu0
    %v178 = vadd.f32 %v117, %v177
    %179 = vmatmul.f32.gmra.mxu0 %v136
    %v180 = vpop.f32.mrf.mxu0
    %v181 = vadd.f32 %v117, %v180
    %182 = vmatmul.f32.gmra.mxu0 %v139
    %v183 = vpop.f32.mrf.mxu0
    %v184 = vadd.f32 %v117, %v183
    %185 = vmatmul.f32.gmra.mxu0 %v142
    %v186 = vpop.f32.mrf.mxu0
    %v187 = vadd.f32 %v117, %v186
    %188 = vdwg.mxu0
    %v189 = vld [vmem:[#allocation3] sm:$0xff]
    %v190 = vld [vmem:[#allocation6] sm:$0xff]
    %vm191 = vcmask 261120
    %v193 = vsel %vm191, %v189, 0
    %195 = vmatpush.msra.mxu0 0.0
    %196 = vmatpush.msra.mxu0 0.0
    %197 = vmatpush.msra.mxu0 0.0
    %198 = vmatpush.msra.mxu0 0.0
    %199 = vmatpush.msra.mxu0 0.0
    %200 = vmatpush.msra.mxu0 0.0
    %201 = vmatpush.msra.mxu0 0.0
    %202 = vmatpush.msra.mxu0 0.0
    %203 = vmatpush.msra.mxu0 0.0
    %204 = vmatpush.msra.mxu0 0.0
    %205 = vmatpush.msra.mxu0 0.0
    %206 = vmatpush.msra.mxu0 0.0
    %207 = vmatpush.msra.mxu0 %v114
    %208 = vmatpush.msra.mxu0 %v113
    %209 = vmatpush.msra.mxu0 %v112
    %210 = vmatpush.msra.mxu0 %v111
    %211 = vmatmul.f32.gmra.mxu0 %v193
    %v212 = vpop.f32.mrf.mxu0
    %v213 = vadd.f32 0.0, %v212
    %214 = vdwg.mxu0
    %v215 = vadd.f32 %v166, %v213
    %v216 = vtanh.pop %v215
    %v217 = vmul.f32 %v216, 0.5
    %v218 = vadd.f32 %v217, 0.5
    %220 = vrot.lane.b32.xlu0 %v190, 32
    %v221 = vpop.permute.xlu0 %220
    %v223 = vmul.f32 %v218, %v221
    %225 = vrot.lane.b32.xlu0 %v216, 64
    %v226 = vpop.permute.xlu0 %225
    %v228 = vmul.f32 %v218, %v226
    %230 = vrot.lane.b32.xlu0 %v228, 32
    %v231 = vpop.permute.xlu0 %230
    %v233 = vadd.f32 %v223, %v231
    %v234 = vtanh.pop %v233
    %236 = vrot.lane.b32.xlu0 %v234, 64
    %v237 = vpop.permute.xlu0 %236
    %v239 = vmul.f32 %v218, %v237
    %241 = vrot.lane.b32.xlu0 %v239, 32
    %v242 = vpop.permute.xlu0 %241
    %244 = vst.msk [vmem:[#allocation2] sm:$0xff] %vm191, %v242
    %v245 = vsel %vm191, %v242, 0
    %247 = vmatpush.msra.mxu0 0.0
    %248 = vmatpush.msra.mxu0 0.0
    %249 = vmatpush.msra.mxu0 0.0
    %250 = vmatpush.msra.mxu0 0.0
    %251 = vmatpush.msra.mxu0 0.0
    %252 = vmatpush.msra.mxu0 0.0
    %253 = vmatpush.msra.mxu0 0.0
    %254 = vmatpush.msra.mxu0 0.0
    %255 = vmatpush.msra.mxu0 0.0
    %256 = vmatpush.msra.mxu0 0.0
    %257 = vmatpush.msra.mxu0 0.0
    %258 = vmatpush.msra.mxu0 0.0
    %259 = vmatpush.msra.mxu0 %v114
    %260 = vmatpush.msra.mxu0 %v113
    %261 = vmatpush.msra.mxu0 %v112
    %262 = vmatpush.msra.mxu0 %v111
    %263 = vmatmul.f32.gmra.mxu0 %v245
    %v264 = vpop.f32.mrf.mxu0
    %v265 = vadd.f32 0.0, %v264
    %266 = vdwg.mxu0
    %v267 = vadd.f32 %v169, %v265
    %v268 = vtanh.pop %v267
    %v269 = vmul.f32 %v268, 0.5
    %v270 = vadd.f32 %v269, 0.5
    %v271 = vmul.f32 %v270, %v233
    %273 = vrot.lane.b32.xlu0 %v268, 64
    %v274 = vpop.permute.xlu0 %273
    %v276 = vmul.f32 %v270, %v274
    %278 = vrot.lane.b32.xlu0 %v276, 32
    %v279 = vpop.permute.xlu0 %278
    %v281 = vadd.f32 %v271, %v279
    %v282 = vtanh.pop %v281
    %284 = vrot.lane.b32.xlu0 %v282, 64
    %v285 = vpop.permute.xlu0 %284
    %v287 = vmul.f32 %v270, %v285
    %289 = vrot.lane.b32.xlu0 %v287, 32
    %v290 = vpop.permute.xlu0 %289
    %292 = vst.msk [vmem:[#allocation2 + $0x8] sm:$0xff] %vm191, %v290
    %v293 = vsel %vm191, %v290, 0
    %295 = vmatpush.msra.mxu0 0.0
    %296 = vmatpush.msra.mxu0 0.0
    %297 = vmatpush.msra.mxu0 0.0
    %298 = vmatpush.msra.mxu0 0.0
    %299 = vmatpush.msra.mxu0 0.0
    %300 = vmatpush.msra.mxu0 0.0
    %301 = vmatpush.msra.mxu0 0.0
    %302 = vmatpush.msra.mxu0 0.0
    %303 = vmatpush.msra.mxu0 0.0
    %304 = vmatpush.msra.mxu0 0.0
    %305 = vmatpush.msra.mxu0 0.0
    %306 = vmatpush.msra.mxu0 0.0
    %307 = vmatpush.msra.mxu0 %v114
    %308 = vmatpush.msra.mxu0 %v113
    %309 = vmatpush.msra.mxu0 %v112
    %310 = vmatpush.msra.mxu0 %v111
    %311 = vmatmul.f32.gmra.mxu0 %v293
    %v312 = vpop.f32.mrf.mxu0
    %v313 = vadd.f32 0.0, %v312
    %314 = vdwg.mxu0
    %v315 = vadd.f32 %v172, %v313
    %v316 = vtanh.pop %v315
    %v317 = vmul.f32 %v316, 0.5
    %v318 = vadd.f32 %v317, 0.5
    %v319 = vmul.f32 %v318, %v281
    %321 = vrot.lane.b32.xlu0 %v316, 64
    %v322 = vpop.permute.xlu0 %321
    %v324 = vmul.f32 %v318, %v322
    %326 = vrot.lane.b32.xlu0 %v324, 32
    %v327 = vpop.permute.xlu0 %326
    %v329 = vadd.f32 %v319, %v327
    %v330 = vtanh.pop %v329
    %332 = vrot.lane.b32.xlu0 %v330, 64
    %v333 = vpop.permute.xlu0 %332
    %v335 = vmul.f32 %v318, %v333
    %337 = vrot.lane.b32.xlu0 %v335, 32
    %v338 = vpop.permute.xlu0 %337
    %340 = vst.msk [vmem:[#allocation2 + $0x10] sm:$0xff] %vm191, %v338
    %v341 = vsel %vm191, %v338, 0
    %343 = vmatpush.msra.mxu0 0.0
    %344 = vmatpush.msra.mxu0 0.0
    %345 = vmatpush.msra.mxu0 0.0
    %346 = vmatpush.msra.mxu0 0.0
    %347 = vmatpush.msra.mxu0 0.0
    %348 = vmatpush.msra.mxu0 0.0
    %349 = vmatpush.msra.mxu0 0.0
    %350 = vmatpush.msra.mxu0 0.0
    %351 = vmatpush.msra.mxu0 0.0
    %352 = vmatpush.msra.mxu0 0.0
    %353 = vmatpush.msra.mxu0 0.0
    %354 = vmatpush.msra.mxu0 0.0
    %355 = vmatpush.msra.mxu0 %v114
    %356 = vmatpush.msra.mxu0 %v113
    %357 = vmatpush.msra.mxu0 %v112
    %358 = vmatpush.msra.mxu0 %v111
    %359 = vmatmul.f32.gmra.mxu0 %v341
    %v360 = vpop.f32.mrf.mxu0
    %v361 = vadd.f32 0.0, %v360
    %362 = vdwg.mxu0
    %v363 = vadd.f32 %v175, %v361
    %v364 = vtanh.pop %v363
    %v365 = vmul.f32 %v364, 0.5
    %v366 = vadd.f32 %v365, 0.5
    %v367 = vmul.f32 %v366, %v329
    %369 = vrot.lane.b32.xlu0 %v364, 64
    %v370 = vpop.permute.xlu0 %369
    %v372 = vmul.f32 %v366, %v370
    %374 = vrot.lane.b32.xlu0 %v372, 32
    %v375 = vpop.permute.xlu0 %374
    %v377 = vadd.f32 %v367, %v375
    %v378 = vtanh.pop %v377
    %380 = vrot.lane.b32.xlu0 %v378, 64
    %v381 = vpop.permute.xlu0 %380
    %v383 = vmul.f32 %v366, %v381
    %385 = vrot.lane.b32.xlu0 %v383, 32
    %v386 = vpop.permute.xlu0 %385
    %388 = vst.msk [vmem:[#allocation2 + $0x18] sm:$0xff] %vm191, %v386
    %v389 = vsel %vm191, %v386, 0
    %391 = vmatpush.msra.mxu0 0.0
    %392 = vmatpush.msra.mxu0 0.0
    %393 = vmatpush.msra.mxu0 0.0
    %394 = vmatpush.msra.mxu0 0.0
    %395 = vmatpush.msra.mxu0 0.0
    %396 = vmatpush.msra.mxu0 0.0
    %397 = vmatpush.msra.mxu0 0.0
    %398 = vmatpush.msra.mxu0 0.0
    %399 = vmatpush.msra.mxu0 0.0
    %400 = vmatpush.msra.mxu0 0.0
    %401 = vmatpush.msra.mxu0 0.0
    %402 = vmatpush.msra.mxu0 0.0
    %403 = vmatpush.msra.mxu0 %v114
    %404 = vmatpush.msra.mxu0 %v113
    %405 = vmatpush.msra.mxu0 %v112
    %406 = vmatpush.msra.mxu0 %v111
    %407 = vmatmul.f32.gmra.mxu0 %v389
    %v408 = vpop.f32.mrf.mxu0
    %v409 = vadd.f32 0.0, %v408
    %410 = vdwg.mxu0
    %v411 = vadd.f32 %v178, %v409
    %v412 = vtanh.pop %v411
    %v413 = vmul.f32 %v412, 0.5
    %v414 = vadd.f32 %v413, 0.5
    %v415 = vmul.f32 %v414, %v377
    %417 = vrot.lane.b32.xlu0 %v412, 64
    %v418 = vpop.permute.xlu0 %417
    %v420 = vmul.f32 %v414, %v418
    %422 = vrot.lane.b32.xlu0 %v420, 32
    %v423 = vpop.permute.xlu0 %422
    %v425 = vadd.f32 %v415, %v423
    %v426 = vtanh.pop %v425
    %428 = vrot.lane.b32.xlu0 %v426, 64
    %v429 = vpop.permute.xlu0 %428
    %v431 = vmul.f32 %v414, %v429
    %433 = vrot.lane.b32.xlu0 %v431, 32
    %v434 = vpop.permute.xlu0 %433
    %436 = vst.msk [vmem:[#allocation2 + $0x20] sm:$0xff] %vm191, %v434
    %v437 = vsel %vm191, %v434, 0
    %439 = vmatpush.msra.mxu0 0.0
    %440 = vmatpush.msra.mxu0 0.0
    %441 = vmatpush.msra.mxu0 0.0
    %442 = vmatpush.msra.mxu0 0.0
    %443 = vmatpush.msra.mxu0 0.0
    %444 = vmatpush.msra.mxu0 0.0
    %445 = vmatpush.msra.mxu0 0.0
    %446 = vmatpush.msra.mxu0 0.0
    %447 = vmatpush.msra.mxu0 0.0
    %448 = vmatpush.msra.mxu0 0.0
    %449 = vmatpush.msra.mxu0 0.0
    %450 = vmatpush.msra.mxu0 0.0
    %451 = vmatpush.msra.mxu0 %v114
    %452 = vmatpush.msra.mxu0 %v113
    %453 = vmatpush.msra.mxu0 %v112
    %454 = vmatpush.msra.mxu0 %v111
    %455 = vmatmul.f32.gmra.mxu0 %v437
    %v456 = vpop.f32.mrf.mxu0
    %v457 = vadd.f32 0.0, %v456
    %458 = vdwg.mxu0
    %v459 = vadd.f32 %v181, %v457
    %v460 = vtanh.pop %v459
    %v461 = vmul.f32 %v460, 0.5
    %v462 = vadd.f32 %v461, 0.5
    %v463 = vmul.f32 %v462, %v425
    %465 = vrot.lane.b32.xlu0 %v460, 64
    %v466 = vpop.permute.xlu0 %465
    %v468 = vmul.f32 %v462, %v466
    %470 = vrot.lane.b32.xlu0 %v468, 32
    %v471 = vpop.permute.xlu0 %470
    %v473 = vadd.f32 %v463, %v471
    %v474 = vtanh.pop %v473
    %476 = vrot.lane.b32.xlu0 %v474, 64
    %v477 = vpop.permute.xlu0 %476
    %v479 = vmul.f32 %v462, %v477
    %481 = vrot.lane.b32.xlu0 %v479, 32
    %v482 = vpop.permute.xlu0 %481
    %484 = vst.msk [vmem:[#allocation2 + $0x28] sm:$0xff] %vm191, %v482
    %v485 = vsel %vm191, %v482, 0
    %487 = vmatpush.msra.mxu0 0.0
    %488 = vmatpush.msra.mxu0 0.0
    %489 = vmatpush.msra.mxu0 0.0
    %490 = vmatpush.msra.mxu0 0.0
    %491 = vmatpush.msra.mxu0 0.0
    %492 = vmatpush.msra.mxu0 0.0
    %493 = vmatpush.msra.mxu0 0.0
    %494 = vmatpush.msra.mxu0 0.0
    %495 = vmatpush.msra.mxu0 0.0
    %496 = vmatpush.msra.mxu0 0.0
    %497 = vmatpush.msra.mxu0 0.0
    %498 = vmatpush.msra.mxu0 0.0
    %499 = vmatpush.msra.mxu0 %v114
    %500 = vmatpush.msra.mxu0 %v113
    %501 = vmatpush.msra.mxu0 %v112
    %502 = vmatpush.msra.mxu0 %v111
    %503 = vmatmul.f32.gmra.mxu0 %v485
    %v504 = vpop.f32.mrf.mxu0
    %v505 = vadd.f32 0.0, %v504
    %506 = vdwg.mxu0
    %v507 = vadd.f32 %v184, %v505
    %v508 = vtanh.pop %v507
    %v509 = vmul.f32 %v508, 0.5
    %v510 = vadd.f32 %v509, 0.5
    %v511 = vmul.f32 %v510, %v473
    %513 = vrot.lane.b32.xlu0 %v508, 64
    %v514 = vpop.permute.xlu0 %513
    %v516 = vmul.f32 %v510, %v514
    %518 = vrot.lane.b32.xlu0 %v516, 32
    %v519 = vpop.permute.xlu0 %518
    %v521 = vadd.f32 %v511, %v519
    %v522 = vtanh.pop %v521
    %524 = vrot.lane.b32.xlu0 %v522, 64
    %v525 = vpop.permute.xlu0 %524
    %v527 = vmul.f32 %v510, %v525
    %529 = vrot.lane.b32.xlu0 %v527, 32
    %v530 = vpop.permute.xlu0 %529
    %532 = vst.msk [vmem:[#allocation2 + $0x30] sm:$0xff] %vm191, %v530
    %v533 = vsel %vm191, %v530, 0
    %535 = vmatpush.msra.mxu0 0.0
    %536 = vmatpush.msra.mxu0 0.0
    %537 = vmatpush.msra.mxu0 0.0
    %538 = vmatpush.msra.mxu0 0.0
    %539 = vmatpush.msra.mxu0 0.0
    %540 = vmatpush.msra.mxu0 0.0
    %541 = vmatpush.msra.mxu0 0.0
    %542 = vmatpush.msra.mxu0 0.0
    %543 = vmatpush.msra.mxu0 0.0
    %544 = vmatpush.msra.mxu0 0.0
    %545 = vmatpush.msra.mxu0 0.0
    %546 = vmatpush.msra.mxu0 0.0
    %547 = vmatpush.msra.mxu0 %v114
    %548 = vmatpush.msra.mxu0 %v113
    %549 = vmatpush.msra.mxu0 %v112
    %550 = vmatpush.msra.mxu0 %v111
    %551 = vmatmul.f32.gmra.mxu0 %v533
    %v552 = vpop.f32.mrf.mxu0
    %v553 = vadd.f32 0.0, %v552
    %554 = vdwg.mxu0
    %v555 = vadd.f32 %v187, %v553
    %v556 = vtanh.pop %v555
    %v557 = vmul.f32 %v556, 0.5
    %v558 = vadd.f32 %v557, 0.5
    %v559 = vmul.f32 %v558, %v521
    %561 = vrot.lane.b32.xlu0 %v556, 64
    %v562 = vpop.permute.xlu0 %561
    %v564 = vmul.f32 %v558, %v562
    %566 = vrot.lane.b32.xlu0 %v564, 32
    %v567 = vpop.permute.xlu0 %566
    %v569 = vadd.f32 %v559, %v567
    %v570 = vtanh.pop %v569
    %572 = vrot.lane.b32.xlu0 %v570, 64
    %v573 = vpop.permute.xlu0 %572
    %v575 = vmul.f32 %v558, %v573
    %577 = vrot.lane.b32.xlu0 %v575, 32
    %v578 = vpop.permute.xlu0 %577
    %580 = vst.msk [vmem:[#allocation2 + $0x38] sm:$0xff] %vm191, %v578
    %v581 = vld [vmem:[#allocation2] sm:$0xff]
    %v582 = vld [vmem:[#allocation2 + $0x8] sm:$0xff]
    %v583 = vld [vmem:[#allocation2 + $0x10] sm:$0xff]
    %v584 = vld [vmem:[#allocation2 + $0x18] sm:$0xff]
    %v585 = vld [vmem:[#allocation2 + $0x20] sm:$0xff]
    %v586 = vld [vmem:[#allocation2 + $0x28] sm:$0xff]
    %v587 = vld [vmem:[#allocation2 + $0x30] sm:$0xff]
    %v588 = vld [vmem:[#allocation2 + $0x38] sm:$0xff]
    %v589 = vld [vmem:[%s6] sm:$0xff]
    %v590 = vld [vmem:[%s6 + $0x8] sm:$0xff]
    %v591 = vld [vmem:[%s6 + $0x10] sm:$0xff]
    %v592 = vld [vmem:[%s6 + $0x18] sm:$0xff]
    %v593 = vld [vmem:[#allocation8] sm:$0xff]
    %v594 = vld [vmem:[#allocation8 + $0x8] sm:$0xff]
    %v595 = vld [vmem:[#allocation8 + $0x10] sm:$0xff]
    %v596 = vld [vmem:[#allocation8 + $0x18] sm:$0xff]
    %v597 = vld [vmem:[%s8] sm:$0x1]
    %v599 = vperm.slane %v597, 0
    %v602 = vsel %vm191, %v581, 0
    %v605 = vsel %vm191, %v582, 0
    %v608 = vsel %vm191, %v583, 0
    %v611 = vsel %vm191, %v584, 0
    %v614 = vsel %vm191, %v585, 0
    %v617 = vsel %vm191, %v586, 0
    %v620 = vsel %vm191, %v587, 0
    %v623 = vsel %vm191, %v588, 0
    %625 = vmatpush.msra.mxu0 0.0
    %626 = vmatpush.msra.mxu0 0.0
    %627 = vmatpush.msra.mxu0 0.0
    %628 = vmatpush.msra.mxu0 0.0
    %629 = vmatpush.msra.mxu0 0.0
    %630 = vmatpush.msra.mxu0 0.0
    %631 = vmatpush.msra.mxu0 0.0
    %632 = vmatpush.msra.mxu0 0.0
    %633 = vmatpush.msra.mxu0 0.0
    %634 = vmatpush.msra.mxu0 0.0
    %635 = vmatpush.msra.mxu0 0.0
    %636 = vmatpush.msra.mxu0 0.0
    %637 = vmatpush.msra.mxu0 %v592
    %638 = vmatpush.msra.mxu0 %v591
    %639 = vmatpush.msra.mxu0 %v590
    %640 = vmatpush.msra.mxu0 %v589
    %641 = vmatmul.f32.gmra.mxu0 %v602
    %v642 = vpop.f32.mrf.mxu0
    %v643 = vadd.f32 %v599, %v642
    %644 = vmatmul.f32.gmra.mxu0 %v605
    %v645 = vpop.f32.mrf.mxu0
    %v646 = vadd.f32 %v599, %v645
    %647 = vmatmul.f32.gmra.mxu0 %v608
    %v648 = vpop.f32.mrf.mxu0
    %v649 = vadd.f32 %v599, %v648
    %650 = vmatmul.f32.gmra.mxu0 %v611
    %v651 = vpop.f32.mrf.mxu0
    %v652 = vadd.f32 %v599, %v651
    %653 = vmatmul.f32.gmra.mxu0 %v614
    %v654 = vpop.f32.mrf.mxu0
    %v655 = vadd.f32 %v599, %v654
    %656 = vmatmul.f32.gmra.mxu0 %v617
    %v657 = vpop.f32.mrf.mxu0
    %v658 = vadd.f32 %v599, %v657
    %659 = vmatmul.f32.gmra.mxu0 %v620
    %v660 = vpop.f32.mrf.mxu0
    %v661 = vadd.f32 %v599, %v660
    %662 = vmatmul.f32.gmra.mxu0 %v623
    %v663 = vpop.f32.mrf.mxu0
    %v664 = vadd.f32 %v599, %v663
    %665 = vdwg.mxu0
    %s666 = scalar_lea.vmem [#allocation3], 8
    %v667 = vld [vmem:[%s666] sm:$0xff]
    %s668 = scalar_lea.vmem [#allocation6], 8
    %v669 = vld [vmem:[%s668] sm:$0xff]
    %v671 = vsel %vm191, %v667, 0
    %673 = vmatpush.msra.mxu0 0.0
    %674 = vmatpush.msra.mxu0 0.0
    %675 = vmatpush.msra.mxu0 0.0
    %676 = vmatpush.msra.mxu0 0.0
    %677 = vmatpush.msra.mxu0 0.0
    %678 = vmatpush.msra.mxu0 0.0
    %679 = vmatpush.msra.mxu0 0.0
    %680 = vmatpush.msra.mxu0 0.0
    %681 = vmatpush.msra.mxu0 0.0
    %682 = vmatpush.msra.mxu0 0.0
    %683 = vmatpush.msra.mxu0 0.0
    %684 = vmatpush.msra.mxu0 0.0
    %685 = vmatpush.msra.mxu0 %v596
    %686 = vmatpush.msra.mxu0 %v595
    %687 = vmatpush.msra.mxu0 %v594
    %688 = vmatpush.msra.mxu0 %v593
    %689 = vmatmul.f32.gmra.mxu0 %v671
    %v690 = vpop.f32.mrf.mxu0
    %v691 = vadd.f32 0.0, %v690
    %692 = vdwg.mxu0
    %v693 = vadd.f32 %v643, %v691
    %v694 = vtanh.pop %v693
    %v695 = vmul.f32 %v694, 0.5
    %v696 = vadd.f32 %v695, 0.5
    %698 = vrot.lane.b32.xlu0 %v669, 32
    %v699 = vpop.permute.xlu0 %698
    %v701 = vmul.f32 %v696, %v699
    %703 = vrot.lane.b32.xlu0 %v694, 64
    %v704 = vpop.permute.xlu0 %703
    %v706 = vmul.f32 %v696, %v704
    %708 = vrot.lane.b32.xlu0 %v706, 32
    %v709 = vpop.permute.xlu0 %708
    %v711 = vadd.f32 %v701, %v709
    %v712 = vtanh.pop %v711
    %714 = vrot.lane.b32.xlu0 %v712, 64
    %v715 = vpop.permute.xlu0 %714
    %v717 = vmul.f32 %v696, %v715
    %719 = vrot.lane.b32.xlu0 %v717, 32
    %v720 = vpop.permute.xlu0 %719
    %v721 = vsel %vm191, %v720, 0
    %723 = vmatpush.msra.mxu0 0.0
    %724 = vmatpush.msra.mxu0 0.0
    %725 = vmatpush.msra.mxu0 0.0
    %726 = vmatpush.msra.mxu0 0.0
    %727 = vmatpush.msra.mxu0 0.0
    %728 = vmatpush.msra.mxu0 0.0
    %729 = vmatpush.msra.mxu0 0.0
    %730 = vmatpush.msra.mxu0 0.0
    %731 = vmatpush.msra.mxu0 0.0
    %732 = vmatpush.msra.mxu0 0.0
    %733 = vmatpush.msra.mxu0 0.0
    %734 = vmatpush.msra.mxu0 0.0
    %735 = vmatpush.msra.mxu0 %v596
    %736 = vmatpush.msra.mxu0 %v595
    %737 = vmatpush.msra.mxu0 %v594
    %738 = vmatpush.msra.mxu0 %v593
    %739 = vmatmul.f32.gmra.mxu0 %v721
    %v740 = vpop.f32.mrf.mxu0
    %v741 = vadd.f32 0.0, %v740
    %742 = vdwg.mxu0
    %v743 = vadd.f32 %v646, %v741
    %v744 = vtanh.pop %v743
    %v745 = vmul.f32 %v744, 0.5
    %v746 = vadd.f32 %v745, 0.5
    %v747 = vmul.f32 %v746, %v711
    %749 = vrot.lane.b32.xlu0 %v744, 64
    %v750 = vpop.permute.xlu0 %749
    %v752 = vmul.f32 %v746, %v750
    %754 = vrot.lane.b32.xlu0 %v752, 32
    %v755 = vpop.permute.xlu0 %754
    %v757 = vadd.f32 %v747, %v755
    %v758 = vtanh.pop %v757
    %760 = vrot.lane.b32.xlu0 %v758, 64
    %v761 = vpop.permute.xlu0 %760
    %v763 = vmul.f32 %v746, %v761
    %765 = vrot.lane.b32.xlu0 %v763, 32
    %v766 = vpop.permute.xlu0 %765
    %v767 = vsel %vm191, %v766, 0
    %769 = vmatpush.msra.mxu0 0.0
    %770 = vmatpush.msra.mxu0 0.0
    %771 = vmatpush.msra.mxu0 0.0
    %772 = vmatpush.msra.mxu0 0.0
    %773 = vmatpush.msra.mxu0 0.0
    %774 = vmatpush.msra.mxu0 0.0
    %775 = vmatpush.msra.mxu0 0.0
    %776 = vmatpush.msra.mxu0 0.0
    %777 = vmatpush.msra.mxu0 0.0
    %778 = vmatpush.msra.mxu0 0.0
    %779 = vmatpush.msra.mxu0 0.0
    %780 = vmatpush.msra.mxu0 0.0
    %781 = vmatpush.msra.mxu0 %v596
    %782 = vmatpush.msra.mxu0 %v595
    %783 = vmatpush.msra.mxu0 %v594
    %784 = vmatpush.msra.mxu0 %v593
    %785 = vmatmul.f32.gmra.mxu0 %v767
    %v786 = vpop.f32.mrf.mxu0
    %v787 = vadd.f32 0.0, %v786
    %788 = vdwg.mxu0
    %v789 = vadd.f32 %v649, %v787
    %v790 = vtanh.pop %v789
    %v791 = vmul.f32 %v790, 0.5
    %v792 = vadd.f32 %v791, 0.5
    %v793 = vmul.f32 %v792, %v757
    %795 = vrot.lane.b32.xlu0 %v790, 64
    %v796 = vpop.permute.xlu0 %795
    %v798 = vmul.f32 %v792, %v796
    %800 = vrot.lane.b32.xlu0 %v798, 32
    %v801 = vpop.permute.xlu0 %800
    %v803 = vadd.f32 %v793, %v801
    %v804 = vtanh.pop %v803
    %806 = vrot.lane.b32.xlu0 %v804, 64
    %v807 = vpop.permute.xlu0 %806
    %v809 = vmul.f32 %v792, %v807
    %811 = vrot.lane.b32.xlu0 %v809, 32
    %v812 = vpop.permute.xlu0 %811
    %v813 = vsel %vm191, %v812, 0
    %815 = vmatpush.msra.mxu0 0.0
    %816 = vmatpush.msra.mxu0 0.0
    %817 = vmatpush.msra.mxu0 0.0
    %818 = vmatpush.msra.mxu0 0.0
    %819 = vmatpush.msra.mxu0 0.0
    %820 = vmatpush.msra.mxu0 0.0
    %821 = vmatpush.msra.mxu0 0.0
    %822 = vmatpush.msra.mxu0 0.0
    %823 = vmatpush.msra.mxu0 0.0
    %824 = vmatpush.msra.mxu0 0.0
    %825 = vmatpush.msra.mxu0 0.0
    %826 = vmatpush.msra.mxu0 0.0
    %827 = vmatpush.msra.mxu0 %v596
    %828 = vmatpush.msra.mxu0 %v595
    %829 = vmatpush.msra.mxu0 %v594
    %830 = vmatpush.msra.mxu0 %v593
    %831 = vmatmul.f32.gmra.mxu0 %v813
    %v832 = vpop.f32.mrf.mxu0
    %v833 = vadd.f32 0.0, %v832
    %834 = vdwg.mxu0
    %v835 = vadd.f32 %v652, %v833
    %v836 = vtanh.pop %v835
    %v837 = vmul.f32 %v836, 0.5
    %v838 = vadd.f32 %v837, 0.5
    %v839 = vmul.f32 %v838, %v803
    %841 = vrot.lane.b32.xlu0 %v836, 64
    %v842 = vpop.permute.xlu0 %841
    %v844 = vmul.f32 %v838, %v842
    %846 = vrot.lane.b32.xlu0 %v844, 32
    %v847 = vpop.permute.xlu0 %846
    %v849 = vadd.f32 %v839, %v847
    %v850 = vtanh.pop %v849
    %852 = vrot.lane.b32.xlu0 %v850, 64
    %v853 = vpop.permute.xlu0 %852
    %v855 = vmul.f32 %v838, %v853
    %857 = vrot.lane.b32.xlu0 %v855, 32
    %v858 = vpop.permute.xlu0 %857
    %v859 = vsel %vm191, %v858, 0
    %861 = vmatpush.msra.mxu0 0.0
    %862 = vmatpush.msra.mxu0 0.0
    %863 = vmatpush.msra.mxu0 0.0
    %864 = vmatpush.msra.mxu0 0.0
    %865 = vmatpush.msra.mxu0 0.0
    %866 = vmatpush.msra.mxu0 0.0
    %867 = vmatpush.msra.mxu0 0.0
    %868 = vmatpush.msra.mxu0 0.0
    %869 = vmatpush.msra.mxu0 0.0
    %870 = vmatpush.msra.mxu0 0.0
    %871 = vmatpush.msra.mxu0 0.0
    %872 = vmatpush.msra.mxu0 0.0
    %873 = vmatpush.msra.mxu0 %v596
    %874 = vmatpush.msra.mxu0 %v595
    %875 = vmatpush.msra.mxu0 %v594
    %876 = vmatpush.msra.mxu0 %v593
    %877 = vmatmul.f32.gmra.mxu0 %v859
    %v878 = vpop.f32.mrf.mxu0
    %v879 = vadd.f32 0.0, %v878
    %880 = vdwg.mxu0
    %v881 = vadd.f32 %v655, %v879
    %v882 = vtanh.pop %v881
    %v883 = vmul.f32 %v882, 0.5
    %v884 = vadd.f32 %v883, 0.5
    %v885 = vmul.f32 %v884, %v849
    %887 = vrot.lane.b32.xlu0 %v882, 64
    %v888 = vpop.permute.xlu0 %887
    %v890 = vmul.f32 %v884, %v888
    %892 = vrot.lane.b32.xlu0 %v890, 32
    %v893 = vpop.permute.xlu0 %892
    %v895 = vadd.f32 %v885, %v893
    %v896 = vtanh.pop %v895
    %898 = vrot.lane.b32.xlu0 %v896, 64
    %v899 = vpop.permute.xlu0 %898
    %v901 = vmul.f32 %v884, %v899
    %903 = vrot.lane.b32.xlu0 %v901, 32
    %v904 = vpop.permute.xlu0 %903
    %v905 = vsel %vm191, %v904, 0
    %907 = vmatpush.msra.mxu0 0.0
    %908 = vmatpush.msra.mxu0 0.0
    %909 = vmatpush.msra.mxu0 0.0
    %910 = vmatpush.msra.mxu0 0.0
    %911 = vmatpush.msra.mxu0 0.0
    %912 = vmatpush.msra.mxu0 0.0
    %913 = vmatpush.msra.mxu0 0.0
    %914 = vmatpush.msra.mxu0 0.0
    %915 = vmatpush.msra.mxu0 0.0
    %916 = vmatpush.msra.mxu0 0.0
    %917 = vmatpush.msra.mxu0 0.0
    %918 = vmatpush.msra.mxu0 0.0
    %919 = vmatpush.msra.mxu0 %v596
    %920 = vmatpush.msra.mxu0 %v595
    %921 = vmatpush.msra.mxu0 %v594
    %922 = vmatpush.msra.mxu0 %v593
    %923 = vmatmul.f32.gmra.mxu0 %v905
    %v924 = vpop.f32.mrf.mxu0
    %v925 = vadd.f32 0.0, %v924
    %926 = vdwg.mxu0
    %v927 = vadd.f32 %v658, %v925
    %v928 = vtanh.pop %v927
    %v929 = vmul.f32 %v928, 0.5
    %v930 = vadd.f32 %v929, 0.5
    %v931 = vmul.f32 %v930, %v895
    %933 = vrot.lane.b32.xlu0 %v928, 64
    %v934 = vpop.permute.xlu0 %933
    %v936 = vmul.f32 %v930, %v934
    %938 = vrot.lane.b32.xlu0 %v936, 32
    %v939 = vpop.permute.xlu0 %938
    %v941 = vadd.f32 %v931, %v939
    %v942 = vtanh.pop %v941
    %944 = vrot.lane.b32.xlu0 %v942, 64
    %v945 = vpop.permute.xlu0 %944
    %v947 = vmul.f32 %v930, %v945
    %949 = vrot.lane.b32.xlu0 %v947, 32
    %v950 = vpop.permute.xlu0 %949
    %v951 = vsel %vm191, %v950, 0
    %953 = vmatpush.msra.mxu0 0.0
    %954 = vmatpush.msra.mxu0 0.0
    %955 = vmatpush.msra.mxu0 0.0
    %956 = vmatpush.msra.mxu0 0.0
    %957 = vmatpush.msra.mxu0 0.0
    %958 = vmatpush.msra.mxu0 0.0
    %959 = vmatpush.msra.mxu0 0.0
    %960 = vmatpush.msra.mxu0 0.0
    %961 = vmatpush.msra.mxu0 0.0
    %962 = vmatpush.msra.mxu0 0.0
    %963 = vmatpush.msra.mxu0 0.0
    %964 = vmatpush.msra.mxu0 0.0
    %965 = vmatpush.msra.mxu0 %v596
    %966 = vmatpush.msra.mxu0 %v595
    %967 = vmatpush.msra.mxu0 %v594
    %968 = vmatpush.msra.mxu0 %v593
    %969 = vmatmul.f32.gmra.mxu0 %v951
    %v970 = vpop.f32.mrf.mxu0
    %v971 = vadd.f32 0.0, %v970
    %972 = vdwg.mxu0
    %v973 = vadd.f32 %v661, %v971
    %v974 = vtanh.pop %v973
    %v975 = vmul.f32 %v974, 0.5
    %v976 = vadd.f32 %v975, 0.5
    %v977 = vmul.f32 %v976, %v941
    %979 = vrot.lane.b32.xlu0 %v974, 64
    %v980 = vpop.permute.xlu0 %979
    %v982 = vmul.f32 %v976, %v980
    %984 = vrot.lane.b32.xlu0 %v982, 32
    %v985 = vpop.permute.xlu0 %984
    %v987 = vadd.f32 %v977, %v985
    %v988 = vtanh.pop %v987
    %990 = vrot.lane.b32.xlu0 %v988, 64
    %v991 = vpop.permute.xlu0 %990
    %v993 = vmul.f32 %v976, %v991
    %995 = vrot.lane.b32.xlu0 %v993, 32
    %v996 = vpop.permute.xlu0 %995
    %v997 = vsel %vm191, %v996, 0
    %999 = vmatpush.msra.mxu0 0.0
    %1000 = vmatpush.msra.mxu0 0.0
    %1001 = vmatpush.msra.mxu0 0.0
    %1002 = vmatpush.msra.mxu0 0.0
    %1003 = vmatpush.msra.mxu0 0.0
    %1004 = vmatpush.msra.mxu0 0.0
    %1005 = vmatpush.msra.mxu0 0.0
    %1006 = vmatpush.msra.mxu0 0.0
    %1007 = vmatpush.msra.mxu0 0.0
    %1008 = vmatpush.msra.mxu0 0.0
    %1009 = vmatpush.msra.mxu0 0.0
    %1010 = vmatpush.msra.mxu0 0.0
    %1011 = vmatpush.msra.mxu0 %v596
    %1012 = vmatpush.msra.mxu0 %v595
    %1013 = vmatpush.msra.mxu0 %v594
    %1014 = vmatpush.msra.mxu0 %v593
    %1015 = vmatmul.f32.gmra.mxu0 %v997
    %v1016 = vpop.f32.mrf.mxu0
    %v1017 = vadd.f32 0.0, %v1016
    %1018 = vdwg.mxu0
    %v1019 = vadd.f32 %v664, %v1017
    %v1020 = vtanh.pop %v1019
    %v1021 = vmul.f32 %v1020, 0.5
    %v1022 = vadd.f32 %v1021, 0.5
    %v1023 = vmul.f32 %v1022, %v987
    %1025 = vrot.lane.b32.xlu0 %v1020, 64
    %v1026 = vpop.permute.xlu0 %1025
    %v1028 = vmul.f32 %v1022, %v1026
    %1030 = vrot.lane.b32.xlu0 %v1028, 32
    %v1031 = vpop.permute.xlu0 %1030
    %v1033 = vadd.f32 %v1023, %v1031
    %v1034 = vtanh.pop %v1033
    %1036 = vrot.lane.b32.xlu0 %v1034, 64
    %v1037 = vpop.permute.xlu0 %1036
    %v1039 = vmul.f32 %v1022, %v1037
    %v1040 = vld [vmem:[#allocation9] sm:$0xff]
    %v1041 = vld [vmem:[#allocation9 + $0x8] sm:$0xff]
    %v1042 = vld [vmem:[#allocation9 + $0x10] sm:$0xff]
    %v1043 = vld [vmem:[#allocation9 + $0x18] sm:$0xff]
    %v1044 = vld [vmem:[%s10] sm:$0x1]
    %v1046 = vperm.slane %v1044, 0
    %1049 = vrot.lane.b32.xlu0 %v1039, 32
    %v1050 = vpop.permute.xlu0 %1049
    %v1051 = vsel %vm191, %v1050, 0
    %1053 = vmatpush.msra.mxu0 0.0
    %1054 = vmatpush.msra.mxu0 0.0
    %1055 = vmatpush.msra.mxu0 0.0
    %1056 = vmatpush.msra.mxu0 0.0
    %1057 = vmatpush.msra.mxu0 0.0
    %1058 = vmatpush.msra.mxu0 0.0
    %1059 = vmatpush.msra.mxu0 0.0
    %1060 = vmatpush.msra.mxu0 0.0
    %1061 = vmatpush.msra.mxu0 0.0
    %1062 = vmatpush.msra.mxu0 0.0
    %1063 = vmatpush.msra.mxu0 0.0
    %1064 = vmatpush.msra.mxu0 0.0
    %1065 = vmatpush.msra.mxu0 %v1043
    %1066 = vmatpush.msra.mxu0 %v1042
    %1067 = vmatpush.msra.mxu0 %v1041
    %1068 = vmatpush.msra.mxu0 %v1040
    %1069 = vmatmul.f32.gmra.mxu0 %v1051
    %v1070 = vpop.f32.mrf.mxu0
    %v1071 = vadd.f32 %v1046, %v1070
    %1072 = vdwg.mxu0
    %1073 = vst [vmem:[#allocation11] sm:$0xff] %v1071
    // Predicated region
    $region62: #{tpu_custom_call.1} parent=1 // pred_check
      _
    $region63: #{tpu_custom_call.1} parent=1 // pred_check_branch
      %1075 = sbr.rel (0) target = $region65
    $region64: #{tpu_custom_call.1} parent=1 // pred_region
      %1077 = vsyncadd [#allocation5], 0
      %s1079 = sshll.u32 [#allocation11], 4
      %s1080 = int_to_ptr.vmem [resolvable:$true] %s1079
      %s1081 = sshll.u32 %s11, 4
      %s1082 = int_to_ptr.hbm [resolvable:$true] %s1081
      %1084 = dma.vmem_to_hbm [thread:$0]  %s1080, 128, %s1082, [#allocation5]
    $region65: #{tpu_custom_call.1} parent=1 // pred_fallthru
      _
    // Predicated region
    $region66: #{tpu_custom_call.1} parent=1 // pred_check
      _
    $region67: #{tpu_custom_call.1} parent=1 // pred_check_branch
      %1086 = sbr.rel (0) target = $region69
    $region68: #{tpu_custom_call.1} parent=1 // pred_region
      %1088 = dma.done [#allocation5], 128
    $region69: #{tpu_custom_call.1} parent=1 // pred_fallthru
      _
    %1089 = vsyncpa [#allocation4], 1
    %1090 = vsyncpa [#allocation7], 1
    %1091 = vsyncpa [#allocation10], 1
    %1092 = vsyncpa [#allocation5], 1

</llo_original>
